<compile_context>
chip_gen: v5e
topology: v5e:2x2
jax: 0.10.0
libtpu: 0.0.40
codegen_flags: <defaults>
</compile_context>

<pallas_src>
import math

import jax
import jax.numpy as jnp
from jax import lax
from jax.experimental import pallas as pl
from jax.experimental.pallas import tpu as pltpu


# -----------------------------------------------------------------------------
# Positional-encoding plumbing (wrapper-side, plain JAX).
# -----------------------------------------------------------------------------
def relative_positional_encoding(seq_len: int, d_model: int) -> jnp.ndarray:
    # rows 0 .. 2T-2 = relative positions T-1, ..., 0, ..., -(T-1);
    # row 2T-1 (rel. pos -T) is an unused pad row so the table has 2T rows.
    pos = jnp.arange(seq_len - 1, -seq_len - 1, -1, dtype=jnp.float32)[:, None]
    idx = jnp.arange(0, d_model, 2, dtype=jnp.float32)[None, :]
    div = jnp.exp(-jnp.log(10000.0) * idx / d_model)
    pe = jnp.zeros((2 * seq_len, d_model), jnp.float32)
    pe = pe.at[:, 0::2].set(jnp.sin(pos * div))
    pe = pe.at[:, 1::2].set(jnp.cos(pos * div))
    return pe


def _project_positions(params, T, D):
    """P = pe @ Wpos, computed once outside the kernel (head-major columns)."""
    pe = relative_positional_encoding(T, D).astype(jnp.bfloat16)          # (2T, D)
    return jnp.einsum("jd,dm->jm", pe, params["wpos"].astype(jnp.bfloat16),
                      preferred_element_type=jnp.float32).astype(jnp.bfloat16)


def _permute_positions_for_roll(P, T, L):
    """Row-permuted, zero-padded table P2 (L rows, L a multiple of 128) such that
    with pos_raw2 = qv @ P2^T the relative shift
        shifted[a, c] = qv[a] . P[T-1+c-a]
    becomes a single per-row circular roll of pos_raw2 (row a rolled by +a):
        P2[(c-a) mod L] == P[T-1+c-a]   for all |c-a| <= T-1.
    The pad rows are zero and never selected (no wrap past them is needed)."""
    D = P.shape[1]
    P2 = jnp.zeros((L, D), P.dtype)
    P2 = P2.at[0:T].set(P[T - 1:2 * T - 1])            # offsets m = 0 .. T-1
    if T > 1:
        P2 = P2.at[L - (T - 1):L].set(P[0:T - 1])      # offsets m = -(T-1) .. -1
    return P2


# -----------------------------------------------------------------------------
# Fused MHSA kernel.  Grid = (B, H//hb): batch "parallel", head-blocks "arbitrary"
# (reduction into the fused output-projection accumulator).
# -----------------------------------------------------------------------------
def _make_mhsa_kernel(hb: int, dh: int, inv_scale: float):

    def kernel(x_ref, p_ref, g_ref, be_ref, wqkv_ref, bqkv_ref, u_ref, vb_ref,
               wo_ref, bo_ref, out_ref, acc_ref, xn_ref):
        j = pl.program_id(1)
        T = xn_ref.shape[0]

        # LayerNorm once per batch element (first head block only), bf16 scratch.
        @pl.when(j == 0)
        def _():
            x = x_ref[0]                                               # (T, D) f32
            mu = jnp.mean(x, axis=-1, keepdims=True)
            xc = x - mu
            var = jnp.mean(xc * xc, axis=-1, keepdims=True)
            xn = (xc * lax.rsqrt(var + 1e-5)) * g_ref[...] + be_ref[...]
            xn_ref[...] = xn.astype(jnp.bfloat16)
            acc_ref[...] = jnp.zeros_like(acc_ref)

        xn_b = xn_ref[...]                                             # (T, D) bf16

        # Fused q|k|v projection for the hb heads of this block: one bf16 MXU
        # matmul (T, D) @ (D, hb*3*dh) with fp32 accumulation.
        qkv = jnp.dot(xn_b, wqkv_ref[...],
                      preferred_element_type=jnp.float32) + bqkv_ref[...]

        for i in range(hb):                        # static unroll, hb in {1, 2}
            base = 3 * dh * i
            q = qkv[:, base:base + dh]                                 # f32
            k = qkv[:, base + dh:base + 2 * dh].astype(jnp.bfloat16)
            v = qkv[:, base + 2 * dh:base + 3 * dh].astype(jnp.bfloat16)
            p = p_ref[:, i * dh:(i + 1) * dh]                          # (L, dh) bf16
            u = u_ref[:, i * dh:(i + 1) * dh]                          # (1, dh) f32
            vb = vb_ref[:, i * dh:(i + 1) * dh]

            qu = (q + u).astype(jnp.bfloat16)      # content bias u
            qv = (q + vb).astype(jnp.bfloat16)     # positional bias v

            content = lax.dot_general(qu, k, (((1,), (1,)), ((), ())),
                                      preferred_element_type=jnp.float32)  # (T, T)
            pos_raw = lax.dot_general(qv, p, (((1,), (1,)), ((), ())),
                                      preferred_element_type=jnp.float32)  # (T, L)

            # Relative shift = ONE strided XLU roll: query row a is rotated by +a
            # lanes; the pre-permuted P table makes shifted[a,c] = qv[a].P[T-1+c-a].
            shifted = pltpu.roll(pos_raw, shift=0, axis=1,
                                 stride=1, stride_axis=0)[:, :T]            # (T, T)

            # Reference module scales by sqrt(d_model) (not sqrt(d_head)).
            score = (content + shifted) * inv_scale
            score = score - jnp.max(score, axis=-1, keepdims=True)
            e = jnp.exp(score)
            attn = e * pl.reciprocal(jnp.sum(e, axis=-1, keepdims=True), approx=True)

            ctx = jnp.dot(attn.astype(jnp.bfloat16), v,
                          preferred_element_type=jnp.float32)               # (T, dh)

            # Fused output projection: accumulate ctx_h @ Wo_h into (T, D) fp32.
            acc_ref[...] += jnp.dot(ctx.astype(jnp.bfloat16),
                                    wo_ref[i * dh:(i + 1) * dh, :],
                                    preferred_element_type=jnp.float32)

        @pl.when(j == pl.num_programs(1) - 1)
        def _():
            # TODO(synk): dropout(p=0.1) is identity in eval mode; train-mode RNG
            #             dropout (pltpu.prng_*) is not implemented.
            out_ref[0] = (acc_ref[...] + bo_ref[...]).astype(out_ref.dtype)

    return kernel


# -----------------------------------------------------------------------------
# Wrapper.
# -----------------------------------------------------------------------------
def mhsa_module_forward(x: jnp.ndarray, params: dict, num_heads: int,
                        heads_per_step: int = 2) -> jnp.ndarray:
    # heads_per_step=2 fills the 256-wide MXU on v6e/v7x; use 1 on v5e (128-wide).
    B, T, D = x.shape
    H = num_heads
    assert D % H == 0
    dh = D // H
    hb = min(heads_per_step, H)
    if H % hb != 0:
        hb = 1
    Hb = H // hb

    # Positional table: projected once, then row-permuted / zero-padded so the
    # in-kernel relative shift is a single strided roll over 128-aligned lanes.
    P = _project_positions(params, T, D)                        # (2T, D) bf16
    L = max(128, -(-2 * T // 128) * 128)
    P2 = _permute_positions_for_roll(P, T, L)                   # (L, D) bf16

    # Head-major fused qkv weight: head h occupies columns [h*3dh, (h+1)*3dh) as
    # [Wq_h | Wk_h | Wv_h].
    def _hm(w):
        return w.reshape(D, H, dh)
    w_qkv = jnp.concatenate([_hm(params["wq"]), _hm(params["wk"]), _hm(params["wv"])],
                            axis=2).reshape(D, 3 * D).astype(jnp.bfloat16)
    b_qkv = jnp.concatenate([params["bq"].reshape(1, H, dh),
                             params["bk"].reshape(1, H, dh),
                             params["bv"].reshape(1, H, dh)],
                            axis=2).reshape(1, 3 * D)           # f32
    w_o = params["wo"].astype(jnp.bfloat16)

    kernel = _make_mhsa_kernel(hb=hb, dh=dh, inv_scale=1.0 / math.sqrt(D))

    # TODO(synk): for large T, add a query-block grid axis (flash-style) so the
    #             fp32 (Tq, T)/(Tq, L) intermediates stay small within v7x's
    #             64 MiB VMEM, and at B=1 that axis also keeps both TCs busy.
    return pl.pallas_call(
        kernel,
        out_shape=jax.ShapeDtypeStruct((B, T, D), x.dtype),
        grid=(B, Hb),
        in_specs=[
            pl.BlockSpec((1, T, D), lambda b, j: (b, 0, 0)),        # x (one DMA per b)
            pl.BlockSpec((L, hb * dh), lambda b, j: (0, j)),        # permuted pos table
            pl.BlockSpec((1, D), lambda b, j: (0, 0)),              # ln gamma
            pl.BlockSpec((1, D), lambda b, j: (0, 0)),              # ln beta
            pl.BlockSpec((D, hb * 3 * dh), lambda b, j: (0, j)),    # fused Wqkv head blk
            pl.BlockSpec((1, hb * 3 * dh), lambda b, j: (0, j)),    # fused bqkv head blk
            pl.BlockSpec((1, hb * dh), lambda b, j: (0, j)),        # u bias head blk
            pl.BlockSpec((1, hb * dh), lambda b, j: (0, j)),        # v bias head blk
            pl.BlockSpec((hb * dh, D), lambda b, j: (j, 0)),        # Wo row block
            pl.BlockSpec((1, D), lambda b, j: (0, 0)),              # bo
        ],
        out_specs=pl.BlockSpec((1, T, D), lambda b, j: (b, 0, 0)),
        scratch_shapes=[pltpu.VMEM((T, D), jnp.float32),            # out-proj accumulator
                        pltpu.VMEM((T, D), jnp.bfloat16)],          # LayerNorm(x) cache
        compiler_params=pltpu.CompilerParams(
            dimension_semantics=("parallel", "arbitrary"),
            vmem_limit_bytes=32 * 1024 * 1024),
    )(x, P2, params["gamma"], params["beta"],
      w_qkv, b_qkv, params["u"], params["v"], w_o, params["bo"])


# -----------------------------------------------------------------------------
# Pure-JAX reference (same bf16 cast points) for a correctness check.
# -----------------------------------------------------------------------------
def mhsa_reference(x, params, num_heads):
    B, T, D = x.shape
    H = num_heads
    dh = D // H
    P = _project_positions(params, T, D)                        # (2T, D) bf16

    mu = jnp.mean(x, axis=-1, keepdims=True)
    xc = x - mu
    var = jnp.mean(xc * xc, axis=-1, keepdims=True)
    xn = (xc * lax.rsqrt(var + 1e-5)) * params["gamma"] + params["beta"]
    xn_b = xn.astype(jnp.bfloat16)

    def proj(w, b):
        return jnp.einsum("btd,dm->btm", xn_b, w.astype(jnp.bfloat16),
                          preferred_element_type=jnp.float32) + b

    q = proj(params["wq"], params["bq"])
    k = proj(params["wk"], params["bk"]).astype(jnp.bfloat16)
    v = proj(params["wv"], params["bv"]).astype(jnp.bfloat16)

    qh = q.reshape(B, T, H, dh)
    kh = k.reshape(B, T, H, dh)
    vh = v.reshape(B, T, H, dh)
    ph = P.reshape(2 * T, H, dh)
    u = params["u"].reshape(H, dh)
    vb = params["v"].reshape(H, dh)

    qu = (qh + u[None, None]).astype(jnp.bfloat16)
    qv = (qh + vb[None, None]).astype(jnp.bfloat16)

    content = jnp.einsum("bahd,bchd->bhac", qu, kh, preferred_element_type=jnp.float32)
    pos_raw = jnp.einsum("bahd,jhd->bhaj", qv, ph, preferred_element_type=jnp.float32)

    a_idx = jnp.arange(T)[:, None]
    c_idx = jnp.arange(T)[None, :]
    idx = jnp.broadcast_to(T - 1 + c_idx - a_idx, (B, H, T, T))
    shifted = jnp.take_along_axis(pos_raw, idx, axis=-1)

    score = (content + shifted) * (1.0 / math.sqrt(D))
    attn = jax.nn.softmax(score, axis=-1)
    ctx = jnp.einsum("bhac,bchd->bahd", attn.astype(jnp.bfloat16), vh,
                     preferred_element_type=jnp.float32)
    ctx = ctx.reshape(B, T, D).astype(jnp.bfloat16)
    out = jnp.einsum("btd,dm->btm", ctx, params["wo"].astype(jnp.bfloat16),
                     preferred_element_type=jnp.float32) + params["bo"]
    return out.astype(x.dtype)


# -----------------------------------------------------------------------------
# Deterministic synthetic parameters + demo run.
# -----------------------------------------------------------------------------
def init_params(key, d_model: int, num_heads: int) -> dict:
    d_head = d_model // num_heads
    ks = jax.random.split(key, 10)
    s = 0.05
    return {
        "gamma": jnp.ones((1, d_model), jnp.float32),
        "beta": jnp.zeros((1, d_model), jnp.float32),
        "wq": s * jax.random.normal(ks[0], (d_model, d_model), jnp.float32),
        "bq": s * jax.random.normal(ks[1], (1, d_model), jnp.float32),
        "wk": s * jax.random.normal(ks[2], (d_model, d_model), jnp.float32),
        "bk": s * jax.random.normal(ks[3], (1, d_model), jnp.float32),
        "wv": s * jax.random.normal(ks[4], (d_model, d_model), jnp.float32),
        "bv": s * jax.random.normal(ks[5], (1, d_model), jnp.float32),
        "wpos": s * jax.random.normal(ks[6], (d_model, d_model), jnp.float32),
        # (num_heads, d_head) biases flattened to (1, D); columns h*dh:(h+1)*dh == head h
        "u": s * jax.random.normal(ks[7], (num_heads, d_head), jnp.float32).reshape(1, d_model),
        "v": s * jax.random.normal(ks[8], (num_heads, d_head), jnp.float32).reshape(1, d_model),
        "wo": s * jax.random.normal(ks[9], (d_model, d_model), jnp.float32),
        "bo": jnp.zeros((1, d_model), jnp.float32),
    }


if __name__ == "__main__":
    # d_head = 128 keeps every per-head block 128-lane aligned (unmasked stores).
    B, T, D, H = 2, 16, 256, 2     # batch, time, inner_dim, num_heads

    root = jax.random.PRNGKey(0)
    k_x, k_p = jax.random.split(root)
    x = jax.random.normal(k_x, (B, T, D), jnp.float32)
    params = init_params(k_p, D, H)

    out = jax.block_until_ready(mhsa_module_forward(x, params, H))
    ref = jax.block_until_ready(mhsa_reference(x, params, H))

    assert out.shape == (B, T, D), out.shape
    assert bool(jnp.all(jnp.isfinite(out)))
    max_err = float(jnp.max(jnp.abs(out - ref)))
    assert bool(jnp.allclose(out, ref, atol=5e-3, rtol=5e-2)), max_err
    print("KERNEL_OK")
</pallas_src>

<mosaic_0001>
module attributes {stable_mosaic.version = 11 : i64} {
  func.func @kernel(%arg0: i32, %arg1: i32, %arg2: memref<1x16x256xf32, #tpu.memory_space<vmem>>, %arg3: memref<128x256xbf16, #tpu.memory_space<vmem>>, %arg4: memref<1x256xf32, #tpu.memory_space<vmem>>, %arg5: memref<1x256xf32, #tpu.memory_space<vmem>>, %arg6: memref<256x768xbf16, #tpu.memory_space<vmem>>, %arg7: memref<1x768xf32, #tpu.memory_space<vmem>>, %arg8: memref<1x256xf32, #tpu.memory_space<vmem>>, %arg9: memref<1x256xf32, #tpu.memory_space<vmem>>, %arg10: memref<256x256xbf16, #tpu.memory_space<vmem>>, %arg11: memref<1x256xf32, #tpu.memory_space<vmem>>, %arg12: memref<1x16x256xf32, #tpu.memory_space<vmem>>, %arg13: memref<16x256xf32, #tpu.memory_space<vmem>>, %arg14: memref<16x256xbf16, #tpu.memory_space<vmem>>) attributes {dimension_semantics = [#tpu.dimension_semantics<parallel>, #tpu.dimension_semantics<arbitrary>], iteration_bounds = array<i64: 2, 1>, scalar_prefetch = 0 : i64, scratch_operands = 2 : i64, tpu.core_type = #tpu.core_type<tc>, window_params = [{transform_indices = @transform_0, window_bounds = array<i64: 1, 16, 256>}, {transform_indices = @transform_1, window_bounds = array<i64: 128, 256>}, {pipeline_mode = #tpu.pipeline_mode<synchronous>, transform_indices = @transform_2, window_bounds = array<i64: 1, 256>}, {pipeline_mode = #tpu.pipeline_mode<synchronous>, transform_indices = @transform_3, window_bounds = array<i64: 1, 256>}, {transform_indices = @transform_4, window_bounds = array<i64: 256, 768>}, {transform_indices = @transform_5, window_bounds = array<i64: 1, 768>}, {transform_indices = @transform_6, window_bounds = array<i64: 1, 256>}, {transform_indices = @transform_7, window_bounds = array<i64: 1, 256>}, {transform_indices = @transform_8, window_bounds = array<i64: 256, 256>}, {pipeline_mode = #tpu.pipeline_mode<synchronous>, transform_indices = @transform_9, window_bounds = array<i64: 1, 256>}, {transform_indices = @transform_10, window_bounds = array<i64: 1, 16, 256>}]} {
    %c0_i32 = arith.constant 0 : i32
    %0 = arith.cmpi eq, %arg1, %c0_i32 : i32
    %1 = arith.extui %0 : i1 to i32
    %c0_i32_0 = arith.constant 0 : i32
    %2 = arith.cmpi ne, %1, %c0_i32_0 : i32
    scf.if %2 {
      %c0_47 = arith.constant 0 : index
      %c0_48 = arith.constant 0 : index
      %c0_49 = arith.constant 0 : index
      %90 = vector.load %arg2[%c0_47, %c0_48, %c0_49] : memref<1x16x256xf32, #tpu.memory_space<vmem>>, vector<1x16x256xf32>
      %91 = vector.shape_cast %90 : vector<1x16x256xf32> to vector<16x256xf32>
      %cst_50 = arith.constant dense<0.000000e+00> : vector<16xf32>
      %92 = vector.multi_reduction <add>, %91, %cst_50 [1] : vector<16x256xf32> to vector<16xf32>
      %93 = vector.shape_cast %92 : vector<16xf32> to vector<16x1xf32>
      %cst_51 = arith.constant 2.560000e+02 : f32
      %94 = vector.broadcast %cst_51 : f32 to vector<16x1xf32>
      %95 = arith.divf %93, %94 : vector<16x1xf32>
      %96 = vector.broadcast %95 : vector<16x1xf32> to vector<16x256xf32>
      %97 = arith.subf %91, %96 : vector<16x256xf32>
      %98 = arith.mulf %97, %97 : vector<16x256xf32>
      %cst_52 = arith.constant dense<0.000000e+00> : vector<16xf32>
      %99 = vector.multi_reduction <add>, %98, %cst_52 [1] : vector<16x256xf32> to vector<16xf32>
      %100 = vector.shape_cast %99 : vector<16xf32> to vector<16x1xf32>
      %cst_53 = arith.constant 2.560000e+02 : f32
      %101 = vector.broadcast %cst_53 : f32 to vector<16x1xf32>
      %102 = arith.divf %100, %101 : vector<16x1xf32>
      %cst_54 = arith.constant 9.99999974E-6 : f32
      %103 = vector.broadcast %cst_54 : f32 to vector<16x1xf32>
      %104 = arith.addf %102, %103 : vector<16x1xf32>
      %105 = math.rsqrt %104 : vector<16x1xf32>
      %106 = vector.broadcast %105 : vector<16x1xf32> to vector<16x256xf32>
      %107 = arith.mulf %97, %106 : vector<16x256xf32>
      %c0_55 = arith.constant 0 : index
      %c0_56 = arith.constant 0 : index
      %108 = vector.load %arg4[%c0_55, %c0_56] : memref<1x256xf32, #tpu.memory_space<vmem>>, vector<1x256xf32>
      %109 = vector.broadcast %108 : vector<1x256xf32> to vector<16x256xf32>
      %110 = arith.mulf %107, %109 : vector<16x256xf32>
      %c0_57 = arith.constant 0 : index
      %c0_58 = arith.constant 0 : index
      %111 = vector.load %arg5[%c0_57, %c0_58] : memref<1x256xf32, #tpu.memory_space<vmem>>, vector<1x256xf32>
      %112 = vector.broadcast %111 : vector<1x256xf32> to vector<16x256xf32>
      %113 = arith.addf %110, %112 : vector<16x256xf32>
      %114 = arith.truncf %113 : vector<16x256xf32> to vector<16x256xbf16>
      %c0_59 = arith.constant 0 : index
      %c0_60 = arith.constant 0 : index
      %115 = vector.load %arg14[%c0_59, %c0_60] : memref<16x256xbf16, #tpu.memory_space<vmem>>, vector<16x256xbf16>
      tpu.vector_store %arg14[%c0_59, %c0_60], %114 {strides = array<i32>} : memref<16x256xbf16, #tpu.memory_space<vmem>>, vector<16x256xbf16>,
      %cst_61 = arith.constant 0.000000e+00 : f32
      %116 = vector.broadcast %cst_61 : f32 to vector<16x256xf32>
      %c0_62 = arith.constant 0 : index
      %c0_63 = arith.constant 0 : index
      %117 = vector.load %arg13[%c0_62, %c0_63] : memref<16x256xf32, #tpu.memory_space<vmem>>, vector<16x256xf32>
      tpu.vector_store %arg13[%c0_62, %c0_63], %116 {strides = array<i32>} : memref<16x256xf32, #tpu.memory_space<vmem>>, vector<16x256xf32>,
    } else {
    }
    %c0 = arith.constant 0 : index
    %c0_1 = arith.constant 0 : index
    %3 = vector.load %arg14[%c0, %c0_1] : memref<16x256xbf16, #tpu.memory_space<vmem>>, vector<16x256xbf16>
    %c0_2 = arith.constant 0 : index
    %c0_3 = arith.constant 0 : index
    %4 = vector.load %arg6[%c0_2, %c0_3] : memref<256x768xbf16, #tpu.memory_space<vmem>>, vector<256x768xbf16>
    %cst = arith.constant dense<0.000000e+00> : vector<16x768xf32>
    %5 = tpu.matmul %3, %4, %cst {dimension_numbers = #tpu.dot_dimension_numbers<[1], [0], [0], [1], [0, 0, 1, 1], [], []>} : vector<16x256xbf16>, vector<256x768xbf16>, vector<16x768xf32> -> vector<16x768xf32>
    %c0_4 = arith.constant 0 : index
    %c0_5 = arith.constant 0 : index
    %6 = vector.load %arg7[%c0_4, %c0_5] : memref<1x768xf32, #tpu.memory_space<vmem>>, vector<1x768xf32>
    %7 = vector.broadcast %6 : vector<1x768xf32> to vector<16x768xf32>
    %8 = arith.addf %5, %7 : vector<16x768xf32>
    %9 = vector.extract_strided_slice %8 {offsets = [0, 0], sizes = [16, 128], strides = [1, 1]} : vector<16x768xf32> to vector<16x128xf32>
    %10 = vector.extract_strided_slice %8 {offsets = [0, 128], sizes = [16, 128], strides = [1, 1]} : vector<16x768xf32> to vector<16x128xf32>
    %11 = arith.truncf %10 : vector<16x128xf32> to vector<16x128xbf16>
    %12 = vector.extract_strided_slice %8 {offsets = [0, 256], sizes = [16, 128], strides = [1, 1]} : vector<16x768xf32> to vector<16x128xf32>
    %13 = arith.truncf %12 : vector<16x128xf32> to vector<16x128xbf16>
    %c0_6 = arith.constant 0 : index
    %c0_7 = arith.constant 0 : index
    %14 = vector.load %arg3[%c0_6, %c0_7] : memref<128x256xbf16, #tpu.memory_space<vmem>>, vector<128x128xbf16>
    %c0_8 = arith.constant 0 : index
    %c0_9 = arith.constant 0 : index
    %15 = vector.load %arg8[%c0_8, %c0_9] : memref<1x256xf32, #tpu.memory_space<vmem>>, vector<1x128xf32>
    %c0_10 = arith.constant 0 : index
    %c0_11 = arith.constant 0 : index
    %16 = vector.load %arg9[%c0_10, %c0_11] : memref<1x256xf32, #tpu.memory_space<vmem>>, vector<1x128xf32>
    %17 = vector.broadcast %15 : vector<1x128xf32> to vector<16x128xf32>
    %18 = arith.addf %9, %17 : vector<16x128xf32>
    %19 = arith.truncf %18 : vector<16x128xf32> to vector<16x128xbf16>
    %20 = vector.broadcast %16 : vector<1x128xf32> to vector<16x128xf32>
    %21 = arith.addf %9, %20 : vector<16x128xf32>
    %22 = arith.truncf %21 : vector<16x128xf32> to vector<16x128xbf16>
    %cst_12 = arith.constant dense<0.000000e+00> : vector<16x16xf32>
    %23 = tpu.matmul %19, %11, %cst_12 {dimension_numbers = #tpu.dot_dimension_numbers<[1], [1], [0], [0], [0, 0, 1, 0], [], []>} : vector<16x128xbf16>, vector<16x128xbf16>, vector<16x16xf32> -> vector<16x16xf32>
    %cst_13 = arith.constant dense<0.000000e+00> : vector<16x128xf32>
    %24 = tpu.matmul %22, %14, %cst_13 {dimension_numbers = #tpu.dot_dimension_numbers<[1], [1], [0], [0], [0, 0, 1, 0], [], []>} : vector<16x128xbf16>, vector<128x128xbf16>, vector<16x128xf32> -> vector<16x128xf32>
    %c0_i32_14 = arith.constant 0 : i32
    %25 = tpu.dynamic_rotate %24 by %c0_i32_14 dim 1 {stride = 1 : si32, stride_dimension = 0 : si32} : vector<16x128xf32>, i32 -> vector<16x128xf32>
    %26 = vector.extract_strided_slice %25 {offsets = [0, 0], sizes = [16, 16], strides = [1, 1]} : vector<16x128xf32> to vector<16x16xf32>
    %27 = arith.addf %23, %26 : vector<16x16xf32>
    %cst_15 = arith.constant 6.250000e-02 : f32
    %28 = vector.broadcast %cst_15 : f32 to vector<16x16xf32>
    %29 = arith.mulf %27, %28 : vector<16x16xf32>
    %cst_16 = arith.constant dense<0xFF800000> : vector<16xf32>
    %30 = vector.multi_reduction <maximumf>, %29, %cst_16 [1] : vector<16x16xf32> to vector<16xf32>
    %31 = vector.shape_cast %30 : vector<16xf32> to vector<16x1xf32>
    %32 = vector.broadcast %31 : vector<16x1xf32> to vector<16x16xf32>
    %33 = arith.subf %29, %32 : vector<16x16xf32>
    %34 = math.exp %33 : vector<16x16xf32>
    %cst_17 = arith.constant dense<0.000000e+00> : vector<16xf32>
    %35 = vector.multi_reduction <add>, %34, %cst_17 [1] : vector<16x16xf32> to vector<16xf32>
    %36 = vector.shape_cast %35 : vector<16xf32> to vector<16x1xf32>
    %37 = tpu.reciprocal %36 {approx = true} : vector<16x1xf32> -> vector<16x1xf32>
    %38 = vector.broadcast %37 : vector<16x1xf32> to vector<16x16xf32>
    %39 = arith.mulf %34, %38 : vector<16x16xf32>
    %40 = arith.truncf %39 : vector<16x16xf32> to vector<16x16xbf16>
    %cst_18 = arith.constant dense<0.000000e+00> : vector<16x128xf32>
    %41 = tpu.matmul %40, %13, %cst_18 {dimension_numbers = #tpu.dot_dimension_numbers<[1], [0], [0], [1], [0, 0, 1, 1], [], []>} : vector<16x16xbf16>, vector<16x128xbf16>, vector<16x128xf32> -> vector<16x128xf32>
    %c0_19 = arith.constant 0 : index
    %c0_20 = arith.constant 0 : index
    %42 = vector.load %arg13[%c0_19, %c0_20] : memref<16x256xf32, #tpu.memory_space<vmem>>, vector<16x256xf32>
    %43 = arith.truncf %41 : vector<16x128xf32> to vector<16x128xbf16>
    %c0_21 = arith.constant 0 : index
    %c0_22 = arith.constant 0 : index
    %44 = vector.load %arg10[%c0_21, %c0_22] : memref<256x256xbf16, #tpu.memory_space<vmem>>, vector<128x256xbf16>
    %cst_23 = arith.constant dense<0.000000e+00> : vector<16x256xf32>
    %45 = tpu.matmul %43, %44, %cst_23 {dimension_numbers = #tpu.dot_dimension_numbers<[1], [0], [0], [1], [0, 0, 1, 1], [], []>} : vector<16x128xbf16>, vector<128x256xbf16>, vector<16x256xf32> -> vector<16x256xf32>
    %46 = arith.addf %42, %45 : vector<16x256xf32>
    %c0_24 = arith.constant 0 : index
    %c0_25 = arith.constant 0 : index
    %47 = vector.load %arg13[%c0_24, %c0_25] : memref<16x256xf32, #tpu.memory_space<vmem>>, vector<16x256xf32>
    tpu.vector_store %arg13[%c0_24, %c0_25], %46 {strides = array<i32>} : memref<16x256xf32, #tpu.memory_space<vmem>>, vector<16x256xf32>,
    %48 = vector.extract_strided_slice %8 {offsets = [0, 384], sizes = [16, 128], strides = [1, 1]} : vector<16x768xf32> to vector<16x128xf32>
    %49 = vector.extract_strided_slice %8 {offsets = [0, 512], sizes = [16, 128], strides = [1, 1]} : vector<16x768xf32> to vector<16x128xf32>
    %50 = arith.truncf %49 : vector<16x128xf32> to vector<16x128xbf16>
    %51 = vector.extract_strided_slice %8 {offsets = [0, 640], sizes = [16, 128], strides = [1, 1]} : vector<16x768xf32> to vector<16x128xf32>
    %52 = arith.truncf %51 : vector<16x128xf32> to vector<16x128xbf16>
    %c0_26 = arith.constant 0 : index
    %c128 = arith.constant 128 : index
    %53 = vector.load %arg3[%c0_26, %c128] : memref<128x256xbf16, #tpu.memory_space<vmem>>, vector<128x128xbf16>
    %c0_27 = arith.constant 0 : index
    %c128_28 = arith.constant 128 : index
    %54 = vector.load %arg8[%c0_27, %c128_28] : memref<1x256xf32, #tpu.memory_space<vmem>>, vector<1x128xf32>
    %c0_29 = arith.constant 0 : index
    %c128_30 = arith.constant 128 : index
    %55 = vector.load %arg9[%c0_29, %c128_30] : memref<1x256xf32, #tpu.memory_space<vmem>>, vector<1x128xf32>
    %56 = vector.broadcast %54 : vector<1x128xf32> to vector<16x128xf32>
    %57 = arith.addf %48, %56 : vector<16x128xf32>
    %58 = arith.truncf %57 : vector<16x128xf32> to vector<16x128xbf16>
    %59 = vector.broadcast %55 : vector<1x128xf32> to vector<16x128xf32>
    %60 = arith.addf %48, %59 : vector<16x128xf32>
    %61 = arith.truncf %60 : vector<16x128xf32> to vector<16x128xbf16>
    %cst_31 = arith.constant dense<0.000000e+00> : vector<16x16xf32>
    %62 = tpu.matmul %58, %50, %cst_31 {dimension_numbers = #tpu.dot_dimension_numbers<[1], [1], [0], [0], [0, 0, 1, 0], [], []>} : vector<16x128xbf16>, vector<16x128xbf16>, vector<16x16xf32> -> vector<16x16xf32>
    %cst_32 = arith.constant dense<0.000000e+00> : vector<16x128xf32>
    %63 = tpu.matmul %61, %53, %cst_32 {dimension_numbers = #tpu.dot_dimension_numbers<[1], [1], [0], [0], [0, 0, 1, 0], [], []>} : vector<16x128xbf16>, vector<128x128xbf16>, vector<16x128xf32> -> vector<16x128xf32>
    %c0_i32_33 = arith.constant 0 : i32
    %64 = tpu.dynamic_rotate %63 by %c0_i32_33 dim 1 {stride = 1 : si32, stride_dimension = 0 : si32} : vector<16x128xf32>, i32 -> vector<16x128xf32>
    %65 = vector.extract_strided_slice %64 {offsets = [0, 0], sizes = [16, 16], strides = [1, 1]} : vector<16x128xf32> to vector<16x16xf32>
    %66 = arith.addf %62, %65 : vector<16x16xf32>
    %cst_34 = arith.constant 6.250000e-02 : f32
    %67 = vector.broadcast %cst_34 : f32 to vector<16x16xf32>
    %68 = arith.mulf %66, %67 : vector<16x16xf32>
    %cst_35 = arith.constant dense<0xFF800000> : vector<16xf32>
    %69 = vector.multi_reduction <maximumf>, %68, %cst_35 [1] : vector<16x16xf32> to vector<16xf32>
    %70 = vector.shape_cast %69 : vector<16xf32> to vector<16x1xf32>
    %71 = vector.broadcast %70 : vector<16x1xf32> to vector<16x16xf32>
    %72 = arith.subf %68, %71 : vector<16x16xf32>
    %73 = math.exp %72 : vector<16x16xf32>
    %cst_36 = arith.constant dense<0.000000e+00> : vector<16xf32>
    %74 = vector.multi_reduction <add>, %73, %cst_36 [1] : vector<16x16xf32> to vector<16xf32>
    %75 = vector.shape_cast %74 : vector<16xf32> to vector<16x1xf32>
    %76 = tpu.reciprocal %75 {approx = true} : vector<16x1xf32> -> vector<16x1xf32>
    %77 = vector.broadcast %76 : vector<16x1xf32> to vector<16x16xf32>
    %78 = arith.mulf %73, %77 : vector<16x16xf32>
    %79 = arith.truncf %78 : vector<16x16xf32> to vector<16x16xbf16>
    %cst_37 = arith.constant dense<0.000000e+00> : vector<16x128xf32>
    %80 = tpu.matmul %79, %52, %cst_37 {dimension_numbers = #tpu.dot_dimension_numbers<[1], [0], [0], [1], [0, 0, 1, 1], [], []>} : vector<16x16xbf16>, vector<16x128xbf16>, vector<16x128xf32> -> vector<16x128xf32>
    %c0_38 = arith.constant 0 : index
    %c0_39 = arith.constant 0 : index
    %81 = vector.load %arg13[%c0_38, %c0_39] : memref<16x256xf32, #tpu.memory_space<vmem>>, vector<16x256xf32>
    %82 = arith.truncf %80 : vector<16x128xf32> to vector<16x128xbf16>
    %c128_40 = arith.constant 128 : index
    %c0_41 = arith.constant 0 : index
    %83 = vector.load %arg10[%c128_40, %c0_41] : memref<256x256xbf16, #tpu.memory_space<vmem>>, vector<128x256xbf16>
    %cst_42 = arith.constant dense<0.000000e+00> : vector<16x256xf32>
    %84 = tpu.matmul %82, %83, %cst_42 {dimension_numbers = #tpu.dot_dimension_numbers<[1], [0], [0], [1], [0, 0, 1, 1], [], []>} : vector<16x128xbf16>, vector<128x256xbf16>, vector<16x256xf32> -> vector<16x256xf32>
    %85 = arith.addf %81, %84 : vector<16x256xf32>
    %c0_43 = arith.constant 0 : index
    %c0_44 = arith.constant 0 : index
    %86 = vector.load %arg13[%c0_43, %c0_44] : memref<16x256xf32, #tpu.memory_space<vmem>>, vector<16x256xf32>
    tpu.vector_store %arg13[%c0_43, %c0_44], %85 {strides = array<i32>} : memref<16x256xf32, #tpu.memory_space<vmem>>, vector<16x256xf32>,
    %c0_i32_45 = arith.constant 0 : i32
    %87 = arith.cmpi eq, %arg1, %c0_i32_45 : i32
    %88 = arith.extui %87 : i1 to i32
    %c0_i32_46 = arith.constant 0 : i32
    %89 = arith.cmpi ne, %88, %c0_i32_46 : i32
    scf.if %89 {
      %c0_47 = arith.constant 0 : index
      %c0_48 = arith.constant 0 : index
      %90 = vector.load %arg13[%c0_47, %c0_48] : memref<16x256xf32, #tpu.memory_space<vmem>>, vector<16x256xf32>
      %c0_49 = arith.constant 0 : index
      %c0_50 = arith.constant 0 : index
      %91 = vector.load %arg11[%c0_49, %c0_50] : memref<1x256xf32, #tpu.memory_space<vmem>>, vector<1x256xf32>
      %92 = vector.broadcast %91 : vector<1x256xf32> to vector<16x256xf32>
      %93 = arith.addf %90, %92 : vector<16x256xf32>
      %c0_51 = arith.constant 0 : index
      %c0_52 = arith.constant 0 : index
      %c0_53 = arith.constant 0 : index
      %94 = vector.load %arg12[%c0_51, %c0_52, %c0_53] : memref<1x16x256xf32, #tpu.memory_space<vmem>>, vector<1x16x256xf32>
      %95 = vector.shape_cast %94 : vector<1x16x256xf32> to vector<16x256xf32>
      %96 = vector.shape_cast %93 : vector<16x256xf32> to vector<1x16x256xf32>
      tpu.vector_store %arg12[%c0_51, %c0_52, %c0_53], %96 {strides = array<i32>} : memref<1x16x256xf32, #tpu.memory_space<vmem>>, vector<1x16x256xf32>,
    } else {
    }
    return
  }
  func.func @transform_0(%arg0: i32, %arg1: i32) -> (i32, i32, i32) {
    %c0_i32 = arith.constant 0 : i32
    %c0_i32_0 = arith.constant 0 : i32
    %c0_i32_1 = arith.constant 0 : i32
    return %arg0, %c0_i32, %c0_i32_0 : i32, i32, i32
  }
  func.func @transform_1(%arg0: i32, %arg1: i32) -> (i32, i32) {
    %c0_i32 = arith.constant 0 : i32
    %c0_i32_0 = arith.constant 0 : i32
    return %c0_i32, %arg1 : i32, i32
  }
  func.func @transform_2(%arg0: i32, %arg1: i32) -> (i32, i32) {
    %c0_i32 = arith.constant 0 : i32
    %c0_i32_0 = arith.constant 0 : i32
    %c0_i32_1 = arith.constant 0 : i32
    return %c0_i32, %c0_i32_0 : i32, i32
  }
  func.func @transform_3(%arg0: i32, %arg1: i32) -> (i32, i32) {
    %c0_i32 = arith.constant 0 : i32
    %c0_i32_0 = arith.constant 0 : i32
    %c0_i32_1 = arith.constant 0 : i32
    return %c0_i32, %c0_i32_0 : i32, i32
  }
  func.func @transform_4(%arg0: i32, %arg1: i32) -> (i32, i32) {
    %c0_i32 = arith.constant 0 : i32
    %c0_i32_0 = arith.constant 0 : i32
    return %c0_i32, %arg1 : i32, i32
  }
  func.func @transform_5(%arg0: i32, %arg1: i32) -> (i32, i32) {
    %c0_i32 = arith.constant 0 : i32
    %c0_i32_0 = arith.constant 0 : i32
    return %c0_i32, %arg1 : i32, i32
  }
  func.func @transform_6(%arg0: i32, %arg1: i32) -> (i32, i32) {
    %c0_i32 = arith.constant 0 : i32
    %c0_i32_0 = arith.constant 0 : i32
    return %c0_i32, %arg1 : i32, i32
  }
  func.func @transform_7(%arg0: i32, %arg1: i32) -> (i32, i32) {
    %c0_i32 = arith.constant 0 : i32
    %c0_i32_0 = arith.constant 0 : i32
    return %c0_i32, %arg1 : i32, i32
  }
  func.func @transform_8(%arg0: i32, %arg1: i32) -> (i32, i32) {
    %c0_i32 = arith.constant 0 : i32
    %c0_i32_0 = arith.constant 0 : i32
    return %arg1, %c0_i32 : i32, i32
  }
  func.func @transform_9(%arg0: i32, %arg1: i32) -> (i32, i32) {
    %c0_i32 = arith.constant 0 : i32
    %c0_i32_0 = arith.constant 0 : i32
    %c0_i32_1 = arith.constant 0 : i32
    return %c0_i32, %c0_i32_0 : i32, i32
  }
  func.func @transform_10(%arg0: i32, %arg1: i32) -> (i32, i32, i32) {
    %c0_i32 = arith.constant 0 : i32
    %c0_i32_0 = arith.constant 0 : i32
    %c0_i32_1 = arith.constant 0 : i32
    return %arg0, %c0_i32, %c0_i32_0 : i32, i32, i32
  }
}

</mosaic_0001>

<llo_original>
// kernel: tpu_custom_call.1
$region0: #{tpu_custom_call.1}
  #allocation0 [shape = 'u32[]', space=smem, size = 0x4, offset = 0x4, fixed_abs, tag = 'smem constant byte address 0x4 - core index']
  #allocation1 [shape = 'u32[72,128]{1,0:T(1,128)}', space=vmem, size = 0x9000, scoped, tag = 'internal scratch']
  #allocation2 [shape = 'f32[16,256]{1,0:T(8,128)}', space=vmem, size = 0x4000, scoped, tag = 'scratch operand']
  #allocation3 [shape = 'bf16[16,256]{1,0:T(8,128)(2,1)}', space=vmem, size = 0x2000, scoped, tag = 'scratch operand']
  %s0 = inlined_call_operand.hbm [shape: f32[2,16,256], index: 0, kind: input, shape index: {}]
  %s1 = inlined_call_operand.hbm [shape: bf16[128,256], index: 1, kind: input, shape index: {}]
  %s2 = inlined_call_operand.hbm [shape: f32[1,256], index: 2, kind: input, shape index: {}]
  %s3 = inlined_call_operand.vmem [shape: f32[1,256], index: 3, kind: input, shape index: {}]
  %s4 = inlined_call_operand.hbm [shape: bf16[256,768], index: 4, kind: input, shape index: {}]
  %s5 = inlined_call_operand.hbm [shape: f32[1,768], index: 5, kind: input, shape index: {}]
  %s6 = inlined_call_operand.vmem [shape: f32[1,256], index: 6, kind: input, shape index: {}]
  %s7 = inlined_call_operand.vmem [shape: f32[1,256], index: 7, kind: input, shape index: {}]
  %s8 = inlined_call_operand.hbm [shape: bf16[256,256], index: 8, kind: input, shape index: {}]
  %s9 = inlined_call_operand.vmem [shape: f32[1,256], index: 9, kind: input, shape index: {}]
  %s10 = inlined_call_operand.hbm [shape: f32[2,16,256], index: 10, kind: output, shape index: {}]
  %s11 = sld [smem:[#allocation0]]
  $region105: #{tpu_custom_call.1} parent=0
    _
  %s13 = ssub.s32 1, %s11
  %s14 = scalar_select 0, %s13, %s11
  $region1: #{tpu_custom_call.1} parent=0
    #allocation4 [shape = 'u8[32768]{0}', space=vmem, size = 0x8000, scoped, tag = 'input window, operand 0']
    #allocation5 [shape = 's32[2]{0}', space=sflag, size = 0x8, scoped, tag = 'scoped memory for tpu_custom_call.1']
    #allocation6 [shape = 's32[2]{0}', space=sflag, size = 0x8, scoped, tag = 'scoped memory for tpu_custom_call.1']
    #allocation7 [shape = 'u8[65536]{0}', space=vmem, size = 0x10000, scoped, tag = 'input window, operand 1, single buffered']
    #allocation8 [shape = 's32[1]{0}', space=sflag, size = 0x4, scoped, tag = 'scoped memory for tpu_custom_call.1']
    #allocation9 [shape = 'u8[1024]{0}', space=vmem, size = 0x400, scoped, tag = 'input window, operand 2, single buffered']
    #allocation10 [shape = 'u8[393216]{0}', space=vmem, size = 0x60000, scoped, tag = 'input window, operand 4, single buffered']
    #allocation11 [shape = 's32[1]{0}', space=sflag, size = 0x4, scoped, tag = 'scoped memory for tpu_custom_call.1']
    #allocation12 [shape = 'u8[3072]{0}', space=vmem, size = 0xc00, scoped, tag = 'input window, operand 5, single buffered']
    #allocation13 [shape = 'u8[131072]{0}', space=vmem, size = 0x20000, scoped, tag = 'input window, operand 8, single buffered']
    #allocation14 [shape = 's32[1]{0}', space=sflag, size = 0x4, scoped, tag = 'scoped memory for tpu_custom_call.1']
    #allocation15 [shape = 'u8[32768]{0}', space=vmem, size = 0x8000, scoped, tag = 'output window, operand 0']
    %15 = vsyncpa [#allocation5], 0
    %s16 = scalar_lea.sflag [#allocation5], 1
    %17 = vsyncpa %s16, 0
    %18 = vsyncpa [#allocation8], 0
    %19 = vsyncpa [#allocation11], 0
    %20 = vsyncpa [#allocation14], 0
    %21 = vsyncpa [#allocation6], 0
    %s22 = scalar_lea.sflag [#allocation6], 1
    %23 = vsyncpa %s22, 0
    loop: start=0, step=1, limit=4
    $region2: #{tpu_custom_call.1} parent=1 // loop_pre_header
      _
    $region3: #{tpu_custom_call.1} parent=1 // loop_header
      %s25 = sphi 0, %s29
      %p26 = scmp.ge.s32.totalorder %s25, 4
      %s32 = sphi 0, %s44
      %s33 = sphi 0, %s40
      %s34 = sphi 0, %s32
      %s35 = sphi 0, %s33
      %s36 = sphi 0, %s34
      %s37 = sphi 0, %s35
      %s47 = sphi 0, %s49
      %s50 = sphi 0, %s47
      %s51 = sphi 0, %s50
      %s67 = sphi 0, %s51
      %s73 = sphi 0, %s75
      %s76 = sphi 0, %s73
      %s77 = sphi 0, %s76
      %s93 = sphi 0, %s77
      %s97 = sphi 0, %s97
      %s99 = sphi 0, %s97
      %s100 = sphi 0, %s99
      %s114 = sphi 0, %s100
      %s118 = sphi 0, %s118
      %s120 = sphi 0, %s118
      %s121 = sphi 0, %s120
      %s135 = sphi 0, %s121
      %s141 = sphi 0, %s143
      %s144 = sphi 0, %s141
      %s145 = sphi 0, %s144
      %s161 = sphi 0, %s145
      %s167 = sphi 0, %s169
      %s170 = sphi 0, %s167
      %s171 = sphi 0, %s170
      %s187 = sphi 0, %s171
      %s193 = sphi 0, %s195
      %s196 = sphi 0, %s193
      %s197 = sphi 0, %s196
      %s213 = sphi 0, %s197
      %s219 = sphi 0, %s221
      %s222 = sphi 0, %s219
      %s223 = sphi 0, %s222
      %s239 = sphi 0, %s223
      %s245 = sphi 0, %s247
      %s248 = sphi 0, %s245
      %s249 = sphi 0, %s248
      %s265 = sphi 0, %s249
      %s269 = sphi 0, %s269
      %s271 = sphi 0, %s269
      %s272 = sphi 0, %s271
      %s286 = sphi 0, %s272
      %s292 = sphi 0, %s294
      %s295 = sphi 0, %s292
      %s296 = sphi 0, %s295
      %s312 = sphi 0, %s296
    $region4: #{tpu_custom_call.1} parent=1 // loop_header_branch
      %28 = sbr.rel (%p26) target = $region8
    $region5: #{tpu_custom_call.1} parent=1 // loop_body
      %s30 = ssub.s32 %s25, 1
      %s31 = ssub.s32 %s25, 2
      %s38 = sadd.s32 1, %s33
      %p39 = scmp.ge.s32.totalorder %s38, 1
      %s40 = scalar_select %p39, 0, %s38
      %s41 = sadd.s32 1, %s32
      %s42 = scalar_select %p39, %s41, %s32
      %p43 = scmp.ge.s32.totalorder %s42, 2
      %s44 = scalar_select %p43, 0, %s42
      %s45 = ssub.s32 %s32, %s44
      %p46 = scmp.eq.s32.totalorder %s45, 0
      %s48 = sadd.s32 %s47, 1
      %s49 = scalar_select %p46, %s47, %s48
      %p52 = pneg %p46
      %p53 = scmp.eq.s32.totalorder %s25, 1
      %p54 = por %p52, %p53
      %p55 = scmp.ne.s32.totalorder %s47, %s50
      %p56 = scmp.eq.s32.totalorder %s25, 0
      %p57 = por %p55, %p56
      %p58 = scmp.ne.s32.totalorder %s47, %s50
      %p59 = scmp.eq.s32.totalorder %s30, 1
      %p60 = por %p58, %p59
      %p61 = scmp.ne.s32.totalorder %s50, %s51
      %p62 = scmp.eq.s32.totalorder %s30, 0
      %p63 = por %p61, %p62
      %p64 = scmp.ne.s32.totalorder %s50, %s51
      %p65 = scmp.eq.s32.totalorder %s31, 1
      %p66 = por %p64, %p65
      %p68 = scmp.ne.s32.totalorder %s51, %s67
      %p69 = scmp.eq.s32.totalorder %s31, 0
      %p70 = por %p68, %p69
      %s71 = ssub.s32 %s33, %s40
      %p72 = scmp.eq.s32.totalorder %s71, 0
      %s74 = sadd.s32 %s73, 1
      %s75 = scalar_select %p72, %s73, %s74
      %p78 = pneg %p72
      %p79 = scmp.eq.s32.totalorder %s25, 1
      %p80 = por %p78, %p79
      %p81 = scmp.ne.s32.totalorder %s73, %s76
      %p82 = scmp.eq.s32.totalorder %s25, 0
      %p83 = por %p81, %p82
      %p84 = scmp.ne.s32.totalorder %s73, %s76
      %p85 = scmp.eq.s32.totalorder %s30, 1
      %p86 = por %p84, %p85
      %p87 = scmp.ne.s32.totalorder %s76, %s77
      %p88 = scmp.eq.s32.totalorder %s30, 0
      %p89 = por %p87, %p88
      %p90 = scmp.ne.s32.totalorder %s76, %s77
      %p91 = scmp.eq.s32.totalorder %s31, 1
      %p92 = por %p90, %p91
      %p94 = scmp.ne.s32.totalorder %s77, %s93
      %p95 = scmp.eq.s32.totalorder %s31, 0
      %p96 = por %p94, %p95
      %s98 = sadd.s32 %s97, 1
      %p101 = scmp.eq.s32.totalorder %s25, 1
      %p102 = scmp.ne.s32.totalorder %s97, %s99
      %p103 = scmp.eq.s32.totalorder %s25, 0
      %p104 = por %p102, %p103
      %p105 = scmp.ne.s32.totalorder %s97, %s99
      %p106 = scmp.eq.s32.totalorder %s30, 1
      %p107 = por %p105, %p106
      %p108 = scmp.ne.s32.totalorder %s99, %s100
      %p109 = scmp.eq.s32.totalorder %s30, 0
      %p110 = por %p108, %p109
      %p111 = scmp.ne.s32.totalorder %s99, %s100
      %p112 = scmp.eq.s32.totalorder %s31, 1
      %p113 = por %p111, %p112
      %p115 = scmp.ne.s32.totalorder %s100, %s114
      %p116 = scmp.eq.s32.totalorder %s31, 0
      %p117 = por %p115, %p116
      %s119 = sadd.s32 %s118, 1
      %p122 = scmp.eq.s32.totalorder %s25, 1
      %p123 = scmp.ne.s32.totalorder %s118, %s120
      %p124 = scmp.eq.s32.totalorder %s25, 0
      %p125 = por %p123, %p124
      %p126 = scmp.ne.s32.totalorder %s118, %s120
      %p127 = scmp.eq.s32.totalorder %s30, 1
      %p128 = por %p126, %p127
      %p129 = scmp.ne.s32.totalorder %s120, %s121
      %p130 = scmp.eq.s32.totalorder %s30, 0
      %p131 = por %p129, %p130
      %p132 = scmp.ne.s32.totalorder %s120, %s121
      %p133 = scmp.eq.s32.totalorder %s31, 1
      %p134 = por %p132, %p133
      %p136 = scmp.ne.s32.totalorder %s121, %s135
      %p137 = scmp.eq.s32.totalorder %s31, 0
      %p138 = por %p136, %p137
      %s139 = ssub.s32 %s33, %s40
      %p140 = scmp.eq.s32.totalorder %s139, 0
      %s142 = sadd.s32 %s141, 1
      %s143 = scalar_select %p140, %s141, %s142
      %p146 = pneg %p140
      %p147 = scmp.eq.s32.totalorder %s25, 1
      %p148 = por %p146, %p147
      %p149 = scmp.ne.s32.totalorder %s141, %s144
      %p150 = scmp.eq.s32.totalorder %s25, 0
      %p151 = por %p149, %p150
      %p152 = scmp.ne.s32.totalorder %s141, %s144
      %p153 = scmp.eq.s32.totalorder %s30, 1
      %p154 = por %p152, %p153
      %p155 = scmp.ne.s32.totalorder %s144, %s145
      %p156 = scmp.eq.s32.totalorder %s30, 0
      %p157 = por %p155, %p156
      %p158 = scmp.ne.s32.totalorder %s144, %s145
      %p159 = scmp.eq.s32.totalorder %s31, 1
      %p160 = por %p158, %p159
      %p162 = scmp.ne.s32.totalorder %s145, %s161
      %p163 = scmp.eq.s32.totalorder %s31, 0
      %p164 = por %p162, %p163
      %s165 = ssub.s32 %s33, %s40
      %p166 = scmp.eq.s32.totalorder %s165, 0
      %s168 = sadd.s32 %s167, 1
      %s169 = scalar_select %p166, %s167, %s168
      %p172 = pneg %p166
      %p173 = scmp.eq.s32.totalorder %s25, 1
      %p174 = por %p172, %p173
      %p175 = scmp.ne.s32.totalorder %s167, %s170
      %p176 = scmp.eq.s32.totalorder %s25, 0
      %p177 = por %p175, %p176
      %p178 = scmp.ne.s32.totalorder %s167, %s170
      %p179 = scmp.eq.s32.totalorder %s30, 1
      %p180 = por %p178, %p179
      %p181 = scmp.ne.s32.totalorder %s170, %s171
      %p182 = scmp.eq.s32.totalorder %s30, 0
      %p183 = por %p181, %p182
      %p184 = scmp.ne.s32.totalorder %s170, %s171
      %p185 = scmp.eq.s32.totalorder %s31, 1
      %p186 = por %p184, %p185
      %p188 = scmp.ne.s32.totalorder %s171, %s187
      %p189 = scmp.eq.s32.totalorder %s31, 0
      %p190 = por %p188, %p189
      %s191 = ssub.s32 %s33, %s40
      %p192 = scmp.eq.s32.totalorder %s191, 0
      %s194 = sadd.s32 %s193, 1
      %s195 = scalar_select %p192, %s193, %s194
      %p198 = pneg %p192
      %p199 = scmp.eq.s32.totalorder %s25, 1
      %p200 = por %p198, %p199
      %p201 = scmp.ne.s32.totalorder %s193, %s196
      %p202 = scmp.eq.s32.totalorder %s25, 0
      %p203 = por %p201, %p202
      %p204 = scmp.ne.s32.totalorder %s193, %s196
      %p205 = scmp.eq.s32.totalorder %s30, 1
      %p206 = por %p204, %p205
      %p207 = scmp.ne.s32.totalorder %s196, %s197
      %p208 = scmp.eq.s32.totalorder %s30, 0
      %p209 = por %p207, %p208
      %p210 = scmp.ne.s32.totalorder %s196, %s197
      %p211 = scmp.eq.s32.totalorder %s31, 1
      %p212 = por %p210, %p211
      %p214 = scmp.ne.s32.totalorder %s197, %s213
      %p215 = scmp.eq.s32.totalorder %s31, 0
      %p216 = por %p214, %p215
      %s217 = ssub.s32 %s33, %s40
      %p218 = scmp.eq.s32.totalorder %s217, 0
      %s220 = sadd.s32 %s219, 1
      %s221 = scalar_select %p218, %s219, %s220
      %p224 = pneg %p218
      %p225 = scmp.eq.s32.totalorder %s25, 1
      %p226 = por %p224, %p225
      %p227 = scmp.ne.s32.totalorder %s219, %s222
      %p228 = scmp.eq.s32.totalorder %s25, 0
      %p229 = por %p227, %p228
      %p230 = scmp.ne.s32.totalorder %s219, %s222
      %p231 = scmp.eq.s32.totalorder %s30, 1
      %p232 = por %p230, %p231
      %p233 = scmp.ne.s32.totalorder %s222, %s223
      %p234 = scmp.eq.s32.totalorder %s30, 0
      %p235 = por %p233, %p234
      %p236 = scmp.ne.s32.totalorder %s222, %s223
      %p237 = scmp.eq.s32.totalorder %s31, 1
      %p238 = por %p236, %p237
      %p240 = scmp.ne.s32.totalorder %s223, %s239
      %p241 = scmp.eq.s32.totalorder %s31, 0
      %p242 = por %p240, %p241
      %s243 = ssub.s32 %s33, %s40
      %p244 = scmp.eq.s32.totalorder %s243, 0
      %s246 = sadd.s32 %s245, 1
      %s247 = scalar_select %p244, %s245, %s246
      %p250 = pneg %p244
      %p251 = scmp.eq.s32.totalorder %s25, 1
      %p252 = por %p250, %p251
      %p253 = scmp.ne.s32.totalorder %s245, %s248
      %p254 = scmp.eq.s32.totalorder %s25, 0
      %p255 = por %p253, %p254
      %p256 = scmp.ne.s32.totalorder %s245, %s248
      %p257 = scmp.eq.s32.totalorder %s30, 1
      %p258 = por %p256, %p257
      %p259 = scmp.ne.s32.totalorder %s248, %s249
      %p260 = scmp.eq.s32.totalorder %s30, 0
      %p261 = por %p259, %p260
      %p262 = scmp.ne.s32.totalorder %s248, %s249
      %p263 = scmp.eq.s32.totalorder %s31, 1
      %p264 = por %p262, %p263
      %p266 = scmp.ne.s32.totalorder %s249, %s265
      %p267 = scmp.eq.s32.totalorder %s31, 0
      %p268 = por %p266, %p267
      %s270 = sadd.s32 %s269, 1
      %p273 = scmp.eq.s32.totalorder %s25, 1
      %p274 = scmp.ne.s32.totalorder %s269, %s271
      %p275 = scmp.eq.s32.totalorder %s25, 0
      %p276 = por %p274, %p275
      %p277 = scmp.ne.s32.totalorder %s269, %s271
      %p278 = scmp.eq.s32.totalorder %s30, 1
      %p279 = por %p277, %p278
      %p280 = scmp.ne.s32.totalorder %s271, %s272
      %p281 = scmp.eq.s32.totalorder %s30, 0
      %p282 = por %p280, %p281
      %p283 = scmp.ne.s32.totalorder %s271, %s272
      %p284 = scmp.eq.s32.totalorder %s31, 1
      %p285 = por %p283, %p284
      %p287 = scmp.ne.s32.totalorder %s272, %s286
      %p288 = scmp.eq.s32.totalorder %s31, 0
      %p289 = por %p287, %p288
      %s290 = ssub.s32 %s32, %s44
      %p291 = scmp.eq.s32.totalorder %s290, 0
      %s293 = sadd.s32 %s292, 1
      %s294 = scalar_select %p291, %s292, %s293
      %p297 = pneg %p291
      %p298 = scmp.eq.s32.totalorder %s25, 1
      %p299 = por %p297, %p298
      %p300 = scmp.ne.s32.totalorder %s292, %s295
      %p301 = scmp.eq.s32.totalorder %s25, 0
      %p302 = por %p300, %p301
      %p303 = scmp.ne.s32.totalorder %s292, %s295
      %p304 = scmp.eq.s32.totalorder %s30, 1
      %p305 = por %p303, %p304
      %p306 = scmp.ne.s32.totalorder %s295, %s296
      %p307 = scmp.eq.s32.totalorder %s30, 0
      %p308 = por %p306, %p307
      %p309 = scmp.ne.s32.totalorder %s295, %s296
      %p310 = scmp.eq.s32.totalorder %s31, 1
      %p311 = por %p309, %p310
      %p313 = scmp.ne.s32.totalorder %s296, %s312
      %p314 = scmp.eq.s32.totalorder %s31, 0
      %p315 = por %p313, %p314
      %p316 = scmp.le.s32.totalorder 1, %s25
      %p317 = scmp.lt.s32.totalorder %s25, 3
      %p318 = pnand %p316, %p317
      %p319 = pneg %p318
      // Predicated region
      $region9: #{tpu_custom_call.1} parent=5 // pred_check
        _
      $region10: #{tpu_custom_call.1} parent=5 // pred_check_branch
        %321 = sbr.rel (%p318) target = $region12
      $region11: #{tpu_custom_call.1} parent=5 // pred_region
        %s322 = ssub.s32 %s25, 1
        // Predicated region
        $region13: #{tpu_custom_call.1} parent=11 // pred_check
          %p323 = pneg %p89
        $region14: #{tpu_custom_call.1} parent=11 // pred_check_branch
          %325 = sbr.rel (%p323) target = $region16
        $region15: #{tpu_custom_call.1} parent=11 // pred_region
          %s326 = smul.u32 2, %s35
          %328 = vsyncadd [#allocation8], 0
          %s329 = smul.addr %s326, 4
          %s330 = scalar_lea.hbm %s1, %s329
          %s331 = sshll.u32 %s330, 4
          %s332 = int_to_ptr.hbm [resolvable:$true] %s331
          %s333 = sshll.u32 [#allocation7], 4
          %s334 = int_to_ptr.vmem [resolvable:$true] %s333
          %339 = dma.hbm_to_vmem [thread:$0]  %s332, 2048, %s334, [#allocation8], 128, 128, 8
        $region16: #{tpu_custom_call.1} parent=11 // pred_fallthru
          _
        // Predicated region
        $region17: #{tpu_custom_call.1} parent=11 // pred_check
          %p340 = pneg %p110
        $region18: #{tpu_custom_call.1} parent=11 // pred_check_branch
          %342 = sbr.rel (%p340) target = $region20
        $region19: #{tpu_custom_call.1} parent=11 // pred_region
          %344 = vsyncadd [#allocation8], 0
          %s346 = sshll.u32 %s2, 4
          %s347 = int_to_ptr.hbm [resolvable:$true] %s346
          %s348 = sshll.u32 [#allocation9], 4
          %s349 = int_to_ptr.vmem [resolvable:$true] %s348
          %351 = dma.hbm_to_vmem [thread:$0]  %s347, 32, %s349, [#allocation8]
        $region20: #{tpu_custom_call.1} parent=11 // pred_fallthru
          _
        // Predicated region
        $region21: #{tpu_custom_call.1} parent=11 // pred_check
          %p352 = pneg %p131
        $region22: #{tpu_custom_call.1} parent=11 // pred_check_branch
          %354 = sbr.rel (%p352) target = $region24
        $region23: #{tpu_custom_call.1} parent=11 // pred_region
          _
        $region24: #{tpu_custom_call.1} parent=11 // pred_fallthru
          _
        // Predicated region
        $region25: #{tpu_custom_call.1} parent=11 // pred_check
          %p355 = pneg %p157
        $region26: #{tpu_custom_call.1} parent=11 // pred_check_branch
          %357 = sbr.rel (%p355) target = $region28
        $region27: #{tpu_custom_call.1} parent=11 // pred_region
          %s358 = smul.u32 6, %s35
          %360 = vsyncadd [#allocation11], 0
          %s361 = smul.addr %s358, 4
          %s362 = scalar_lea.hbm %s4, %s361
          %s363 = sshll.u32 %s362, 4
          %s364 = int_to_ptr.hbm [resolvable:$true] %s363
          %s365 = sshll.u32 [#allocation10], 4
          %s366 = int_to_ptr.vmem [resolvable:$true] %s365
          %371 = dma.hbm_to_vmem [thread:$0]  %s364, 12288, %s366, [#allocation11], 384, 384, 24
        $region28: #{tpu_custom_call.1} parent=11 // pred_fallthru
          _
        // Predicated region
        $region29: #{tpu_custom_call.1} parent=11 // pred_check
          %p372 = pneg %p183
        $region30: #{tpu_custom_call.1} parent=11 // pred_check_branch
          %374 = sbr.rel (%p372) target = $region32
        $region31: #{tpu_custom_call.1} parent=11 // pred_region
          %s375 = smul.u32 6, %s35
          %377 = vsyncadd [#allocation11], 0
          %s378 = scalar_lea.hbm %s5, %s375
          %s380 = sshll.u32 %s378, 4
          %s381 = int_to_ptr.hbm [resolvable:$true] %s380
          %s382 = sshll.u32 [#allocation12], 4
          %s383 = int_to_ptr.vmem [resolvable:$true] %s382
          %385 = dma.hbm_to_vmem [thread:$0]  %s381, 96, %s383, [#allocation11]
        $region32: #{tpu_custom_call.1} parent=11 // pred_fallthru
          _
        // Predicated region
        $region33: #{tpu_custom_call.1} parent=11 // pred_check
          %p386 = pneg %p209
        $region34: #{tpu_custom_call.1} parent=11 // pred_check_branch
          %388 = sbr.rel (%p386) target = $region36
        $region35: #{tpu_custom_call.1} parent=11 // pred_region
          %s389 = smul.u32 2, %s35
          %p390 = scmp.lt.s32.totalorder %s389, 1
          %s391 = scalar_select %p390, %s389, 1
          %s392 = scalar_lea.vmem %s6, %s391
          %s393 = smul.u32 2, %s35
        $region36: #{tpu_custom_call.1} parent=11 // pred_fallthru
          _
        // Predicated region
        $region37: #{tpu_custom_call.1} parent=11 // pred_check
          %p394 = pneg %p235
        $region38: #{tpu_custom_call.1} parent=11 // pred_check_branch
          %396 = sbr.rel (%p394) target = $region40
        $region39: #{tpu_custom_call.1} parent=11 // pred_region
          %s397 = smul.u32 2, %s35
          %p398 = scmp.lt.s32.totalorder %s397, 1
          %s399 = scalar_select %p398, %s397, 1
          %s400 = scalar_lea.vmem %s7, %s399
          %s401 = smul.u32 2, %s35
        $region40: #{tpu_custom_call.1} parent=11 // pred_fallthru
          _
        // Predicated region
        $region41: #{tpu_custom_call.1} parent=11 // pred_check
          %p402 = pneg %p261
        $region42: #{tpu_custom_call.1} parent=11 // pred_check_branch
          %404 = sbr.rel (%p402) target = $region44
        $region43: #{tpu_custom_call.1} parent=11 // pred_region
          %s405 = smul.u32 32, %s35
          %407 = vsyncadd [#allocation14], 0
          %s408 = smul.addr %s405, 2
          %s409 = smul.addr %s408, 4
          %s410 = scalar_lea.hbm %s8, %s409
          %s411 = sshll.u32 %s410, 4
          %s412 = int_to_ptr.hbm [resolvable:$true] %s411
          %s413 = sshll.u32 [#allocation13], 4
          %s414 = int_to_ptr.vmem [resolvable:$true] %s413
          %419 = dma.hbm_to_vmem [thread:$0]  %s412, 4096, %s414, [#allocation14], 128, 128, 8
        $region44: #{tpu_custom_call.1} parent=11 // pred_fallthru
          _
        // Predicated region
        $region45: #{tpu_custom_call.1} parent=11 // pred_check
          %p420 = pneg %p282
        $region46: #{tpu_custom_call.1} parent=11 // pred_check_branch
          %422 = sbr.rel (%p420) target = $region48
        $region47: #{tpu_custom_call.1} parent=11 // pred_region
          _
        $region48: #{tpu_custom_call.1} parent=11 // pred_fallthru
          _
      $region12: #{tpu_custom_call.1} parent=5 // pred_fallthru
        _
      %p423 = scmp.lt.s32.totalorder %s25, 2
      // Predicated region
      $region49: #{tpu_custom_call.1} parent=5 // pred_check
        %p424 = pneg %p423
      $region50: #{tpu_custom_call.1} parent=5 // pred_check_branch
        %426 = sbr.rel (%p424) target = $region52
      $region51: #{tpu_custom_call.1} parent=5 // pred_region
        // Predicated region
        $region53: #{tpu_custom_call.1} parent=51 // pred_check
          %p427 = pneg %p57
        $region54: #{tpu_custom_call.1} parent=51 // pred_check_branch
          %429 = sbr.rel (%p427) target = $region56
        $region55: #{tpu_custom_call.1} parent=51 // pred_region
          %s430 = sand.u32 %s47, 1
          %s431 = scalar_lea.sflag [#allocation5], %s430
          %s432 = sand.u32 %s47, 1
          %s433 = smul.addr %s432, 32
          %s434 = scalar_lea.vmem [#allocation4], %s433
          %436 = vsyncadd %s431, 0
          %s437 = smul.addr %s32, 4
          %s438 = smul.addr %s437, 8
          %s439 = scalar_lea.hbm %s0, %s438
          %s440 = sshll.u32 %s439, 4
          %s441 = int_to_ptr.hbm [resolvable:$true] %s440
          %s442 = sshll.u32 %s434, 4
          %s443 = int_to_ptr.vmem [resolvable:$true] %s442
          %448 = dma.hbm_to_vmem [thread:$0]  %s441, 512, %s443, %s431, 256, 256, 16
        $region56: #{tpu_custom_call.1} parent=51 // pred_fallthru
          _
      $region52: #{tpu_custom_call.1} parent=5 // pred_fallthru
        _
      %p449 = scmp.le.s32.totalorder 1, %s25
      %p450 = scmp.lt.s32.totalorder %s25, 3
      %p451 = pnand %p449, %p450
      %p452 = pneg %p451
      // Predicated region
      $region57: #{tpu_custom_call.1} parent=5 // pred_check
        _
      $region58: #{tpu_custom_call.1} parent=5 // pred_check_branch
        %454 = sbr.rel (%p451) target = $region60
      $region59: #{tpu_custom_call.1} parent=5 // pred_region
        %s455 = ssub.s32 %s25, 1
        %s456 = sand.u32 %s50, 1
        %s457 = scalar_lea.sflag [#allocation5], %s456
        %s458 = sand.u32 %s50, 1
        %s459 = smul.addr %s458, 32
        %s460 = scalar_lea.vmem [#allocation4], %s459
        // Predicated region
        $region61: #{tpu_custom_call.1} parent=59 // pred_check
          %p461 = pneg %p63
        $region62: #{tpu_custom_call.1} parent=59 // pred_check_branch
          %463 = sbr.rel (%p461) target = $region64
        $region63: #{tpu_custom_call.1} parent=59 // pred_region
          %465 = dma.done %s457, 512
        $region64: #{tpu_custom_call.1} parent=59 // pred_fallthru
          _
        // Predicated region
        $region65: #{tpu_custom_call.1} parent=59 // pred_check
          %p466 = pneg %p89
        $region66: #{tpu_custom_call.1} parent=59 // pred_check_branch
          %468 = sbr.rel (%p466) target = $region68
        $region67: #{tpu_custom_call.1} parent=59 // pred_region
          %470 = dma.done [#allocation8], 2048
        $region68: #{tpu_custom_call.1} parent=59 // pred_fallthru
          _
        // Predicated region
        $region69: #{tpu_custom_call.1} parent=59 // pred_check
          %p471 = pneg %p110
        $region70: #{tpu_custom_call.1} parent=59 // pred_check_branch
          %473 = sbr.rel (%p471) target = $region72
        $region71: #{tpu_custom_call.1} parent=59 // pred_region
          %475 = dma.done [#allocation8], 32
        $region72: #{tpu_custom_call.1} parent=59 // pred_fallthru
          _
        // Predicated region
        $region73: #{tpu_custom_call.1} parent=59 // pred_check
          %p476 = pneg %p157
        $region74: #{tpu_custom_call.1} parent=59 // pred_check_branch
          %478 = sbr.rel (%p476) target = $region76
        $region75: #{tpu_custom_call.1} parent=59 // pred_region
          %480 = dma.done [#allocation11], 12288
        $region76: #{tpu_custom_call.1} parent=59 // pred_fallthru
          _
        // Predicated region
        $region77: #{tpu_custom_call.1} parent=59 // pred_check
          %p481 = pneg %p183
        $region78: #{tpu_custom_call.1} parent=59 // pred_check_branch
          %483 = sbr.rel (%p481) target = $region80
        $region79: #{tpu_custom_call.1} parent=59 // pred_region
          %485 = dma.done [#allocation11], 96
        $region80: #{tpu_custom_call.1} parent=59 // pred_fallthru
          _
        // Predicated region
        $region81: #{tpu_custom_call.1} parent=59 // pred_check
          %p486 = pneg %p261
        $region82: #{tpu_custom_call.1} parent=59 // pred_check_branch
          %488 = sbr.rel (%p486) target = $region84
        $region83: #{tpu_custom_call.1} parent=59 // pred_region
          %490 = dma.done [#allocation14], 4096
        $region84: #{tpu_custom_call.1} parent=59 // pred_fallthru
          _
        %s491 = sand.u32 %s50, 1
        %s492 = scalar_lea.sflag [#allocation5], %s491
        %s493 = sand.u32 %s50, 1
        %s494 = smul.addr %s493, 32
        %s495 = scalar_lea.vmem [#allocation4], %s494
        %p496 = pneg %p63
        %p497 = pneg %p60
        %p498 = pneg %p89
        %p499 = pneg %p86
        %p500 = pneg %p110
        %p501 = pneg %p107
        %p502 = pneg %p131
        %p503 = pneg %p128
        %p504 = pneg %p157
        %p505 = pneg %p154
        %p506 = pneg %p183
        %p507 = pneg %p180
        %s508 = smul.u32 2, %s35
        %p509 = scmp.lt.s32.totalorder %s508, 1
        %s510 = scalar_select %p509, %s508, 1
        %s511 = scalar_lea.vmem %s6, %s510
        %p512 = pneg %p209
        %p513 = pneg %p206
        %s514 = smul.u32 2, %s35
        %p515 = scmp.lt.s32.totalorder %s514, 1
        %s516 = scalar_select %p515, %s514, 1
        %s517 = scalar_lea.vmem %s7, %s516
        %p518 = pneg %p235
        %p519 = pneg %p232
        %p520 = pneg %p261
        %p521 = pneg %p258
        %p522 = pneg %p282
        %p523 = pneg %p279
        %p524 = pneg %p308
        %p525 = pneg %p305
        %s526 = sand.u32 %s295, 1
        %s527 = scalar_lea.sflag [#allocation6], %s526
        %s528 = sand.u32 %s295, 1
        %s529 = smul.addr %s528, 32
        %s530 = scalar_lea.vmem [#allocation15], %s529
        %s531 = smul.u32 2, %s35
        %s532 = smul.u32 6, %s35
        %s533 = smul.u32 6, %s35
        %s534 = smul.u32 2, %s35
        %p535 = scmp.lt.s32.totalorder %s534, 1
        %s536 = scalar_select %p535, %s534, 1
        %s537 = scalar_lea.vmem %s6, %s536
        %s538 = smul.u32 2, %s35
        %s539 = smul.u32 2, %s35
        %p540 = scmp.lt.s32.totalorder %s539, 1
        %s541 = scalar_select %p540, %s539, 1
        %s542 = scalar_lea.vmem %s7, %s541
        %s543 = smul.u32 2, %s35
        %s544 = smul.u32 32, %s35
        %p546 = scmp.eq.s32.totalorder %s35, 0
        // Predicated region
        $region85: #{tpu_custom_call.1} parent=59 // pred_check
          %p547 = pneg %p546
        $region86: #{tpu_custom_call.1} parent=59 // pred_check_branch
          %549 = sbr.rel (%p547) target = $region88
        $region87: #{tpu_custom_call.1} parent=59 // pred_region
          %v550 = vld [vmem:[%s460] sm:$0xff]
          %v551 = vld [vmem:[%s460 + $0x8] sm:$0xff]
          %v552 = vld [vmem:[%s460 + $0x10] sm:$0xff]
          %v553 = vld [vmem:[%s460 + $0x18] sm:$0xff]
          %v554 = vadd.f32 %v550, %v551
          %555 = vadd.xlane.f32.xlu0 %v554
          %v556 = vpop.xlane.xlu0 %555
          %v557 = vadd.f32 %v552, %v553
          %558 = vadd.xlane.f32.xlu0 %v557
          %v559 = vpop.xlane.xlu0 %558
          %v560 = vrcp.pop 256.0
          %v561 = vmul.f32 256.0, %v560
          %v562 = vsub.f32 1.0, %v561
          %v563 = vmul.f32 %v560, %v562
          %v564 = vadd.f32 %v560, %v563
          %vm565 = vweird.f32 %v560
          %v566 = vsel %vm565, %v560, %v564
          %v567 = vmul.f32 %v556, %v566
          %v568 = vmul.f32 %v559, %v566
          %v569 = vsub.f32 %v550, %v567
          %v570 = vsub.f32 %v551, %v567
          %v571 = vsub.f32 %v552, %v568
          %v572 = vsub.f32 %v553, %v568
          %v573 = vmul.f32 %v569, %v569
          %v574 = vmul.f32 %v570, %v570
          %v575 = vmul.f32 %v571, %v571
          %v576 = vmul.f32 %v572, %v572
          %v577 = vadd.f32 %v573, %v574
          %578 = vadd.xlane.f32.xlu0 %v577
          %v579 = vpop.xlane.xlu0 %578
          %v580 = vadd.f32 %v575, %v576
          %581 = vadd.xlane.f32.xlu0 %v580
          %v582 = vpop.xlane.xlu0 %581
          %v583 = vmul.f32 %v579, %v566
          %v584 = vmul.f32 %v582, %v566
          %v585 = vadd.f32 %v583, 1e-05
          %v586 = vadd.f32 %v584, 1e-05
          %v587 = vrsqrt.pop %v585
          %v588 = vmul.f32 %v587, %v585
          %v589 = vmul.f32 %v588, %v587
          %v590 = vmul.f32 0.5, %v589
          %v591 = vsub.f32 1.5, %v590
          %v592 = vmul.f32 %v587, %v591
          %vm593 = vweird.f32 %v585
          %vm594 = vweird.f32 %v587
          %vm595 = vmor %vm593, %vm594
          %v596 = vsel %vm595, %v587, %v592
          %v597 = vrsqrt.pop %v586
          %v598 = vmul.f32 %v597, %v586
          %v599 = vmul.f32 %v598, %v597
          %v600 = vmul.f32 0.5, %v599
          %v601 = vsub.f32 1.5, %v600
          %v602 = vmul.f32 %v597, %v601
          %vm603 = vweird.f32 %v586
          %vm604 = vweird.f32 %v597
          %vm605 = vmor %vm603, %vm604
          %v606 = vsel %vm605, %v597, %v602
          %v607 = vmul.f32 %v569, %v596
          %v608 = vmul.f32 %v570, %v596
          %v609 = vmul.f32 %v571, %v606
          %v610 = vmul.f32 %v572, %v606
          %v611 = vld [vmem:[#allocation9] sm:$0x3]
          %v613 = vperm.slane %v611, 0
          %v614 = vperm.slane %v611, 1
          %v617 = vmul.f32 %v607, %v613
          %v618 = vmul.f32 %v608, %v614
          %v619 = vmul.f32 %v609, %v613
          %v620 = vmul.f32 %v610, %v614
          %v621 = vld [vmem:[%s3] sm:$0x3]
          %v623 = vperm.slane %v621, 0
          %v624 = vperm.slane %v621, 1
          %v627 = vadd.f32 %v617, %v623
          %v628 = vadd.f32 %v618, %v624
          %v629 = vadd.f32 %v619, %v623
          %v630 = vadd.f32 %v620, %v624
          %v631 = vpack.c.bf16 %v628, %v627
          %v632 = vpack.c.bf16 %v630, %v629
          %633 = vst [vmem:[#allocation3] sm:$0xff] %v631
          %634 = vst [vmem:[#allocation3 + $0x8] sm:$0xff] %v632
          %635 = vst [vmem:[#allocation2] sm:$0xff] 0.0
          %636 = vst [vmem:[#allocation2 + $0x8] sm:$0xff] 0.0
          %637 = vst [vmem:[#allocation2 + $0x10] sm:$0xff] 0.0
          %638 = vst [vmem:[#allocation2 + $0x18] sm:$0xff] 0.0
        $region88: #{tpu_custom_call.1} parent=59 // pred_fallthru
          _
        %v639 = vld [vmem:[#allocation3] sm:$0xff]
        %v640 = vld [vmem:[#allocation3 + $0x8] sm:$0xff]
        %v641 = vld [vmem:[#allocation10] sm:$0xff]
        %v642 = vld [vmem:[#allocation10 + $0x8] sm:$0xff]
        %v643 = vld [vmem:[#allocation10 + $0x10] sm:$0xff]
        %v644 = vld [vmem:[#allocation10 + $0x18] sm:$0xff]
        %v645 = vld [vmem:[#allocation10 + $0x20] sm:$0xff]
        %v646 = vld [vmem:[#allocation10 + $0x28] sm:$0xff]
        %v647 = vld [vmem:[#allocation10 + $0x30] sm:$0xff]
        %v648 = vld [vmem:[#allocation10 + $0x38] sm:$0xff]
        %v649 = vld [vmem:[#allocation10 + $0x40] sm:$0xff]
        %v650 = vld [vmem:[#allocation10 + $0x48] sm:$0xff]
        %v651 = vld [vmem:[#allocation10 + $0x50] sm:$0xff]
        %v652 = vld [vmem:[#allocation10 + $0x58] sm:$0xff]
        %v653 = vld [vmem:[#allocation10 + $0x60] sm:$0xff]
        %v654 = vld [vmem:[#allocation10 + $0x68] sm:$0xff]
        %v655 = vld [vmem:[#allocation10 + $0x70] sm:$0xff]
        %v656 = vld [vmem:[#allocation10 + $0x78] sm:$0xff]
        %v657 = vld [vmem:[#allocation10 + $0x80] sm:$0xff]
        %v658 = vld [vmem:[#allocation10 + $0x88] sm:$0xff]
        %v659 = vld [vmem:[#allocation10 + $0x90] sm:$0xff]
        %v660 = vld [vmem:[#allocation10 + $0x98] sm:$0xff]
        %v661 = vld [vmem:[#allocation10 + $0xa0] sm:$0xff]
        %v662 = vld [vmem:[#allocation10 + $0xa8] sm:$0xff]
        %v663 = vld [vmem:[#allocation10 + $0xb0] sm:$0xff]
        %v664 = vld [vmem:[#allocation10 + $0xb8] sm:$0xff]
        %v665 = vld [vmem:[#allocation10 + $0xc0] sm:$0xff]
        %v666 = vld [vmem:[#allocation10 + $0xc8] sm:$0xff]
        %v667 = vld [vmem:[#allocation10 + $0xd0] sm:$0xff]
        %v668 = vld [vmem:[#allocation10 + $0xd8] sm:$0xff]
        %v669 = vld [vmem:[#allocation10 + $0xe0] sm:$0xff]
        %v670 = vld [vmem:[#allocation10 + $0xe8] sm:$0xff]
        %v671 = vld [vmem:[#allocation10 + $0xf0] sm:$0xff]
        %v672 = vld [vmem:[#allocation10 + $0xf8] sm:$0xff]
        %v673 = vld [vmem:[#allocation10 + $0x100] sm:$0xff]
        %v674 = vld [vmem:[#allocation10 + $0x108] sm:$0xff]
        %v675 = vld [vmem:[#allocation10 + $0x110] sm:$0xff]
        %v676 = vld [vmem:[#allocation10 + $0x118] sm:$0xff]
        %v677 = vld [vmem:[#allocation10 + $0x120] sm:$0xff]
        %v678 = vld [vmem:[#allocation10 + $0x128] sm:$0xff]
        %v679 = vld [vmem:[#allocation10 + $0x130] sm:$0xff]
        %v680 = vld [vmem:[#allocation10 + $0x138] sm:$0xff]
        %v681 = vld [vmem:[#allocation10 + $0x140] sm:$0xff]
        %v682 = vld [vmem:[#allocation10 + $0x148] sm:$0xff]
        %v683 = vld [vmem:[#allocation10 + $0x150] sm:$0xff]
        %v684 = vld [vmem:[#allocation10 + $0x158] sm:$0xff]
        %v685 = vld [vmem:[#allocation10 + $0x160] sm:$0xff]
        %v686 = vld [vmem:[#allocation10 + $0x168] sm:$0xff]
        %v687 = vld [vmem:[#allocation10 + $0x170] sm:$0xff]
        %v688 = vld [vmem:[#allocation10 + $0x178] sm:$0xff]
        %v689 = vld [vmem:[#allocation10 + $0x180] sm:$0xff]
        %v690 = vld [vmem:[#allocation10 + $0x188] sm:$0xff]
        %v691 = vld [vmem:[#allocation10 + $0x190] sm:$0xff]
        %v692 = vld [vmem:[#allocation10 + $0x198] sm:$0xff]
        %v693 = vld [vmem:[#allocation10 + $0x1a0] sm:$0xff]
        %v694 = vld [vmem:[#allocation10 + $0x1a8] sm:$0xff]
        %v695 = vld [vmem:[#allocation10 + $0x1b0] sm:$0xff]
        %v696 = vld [vmem:[#allocation10 + $0x1b8] sm:$0xff]
        %v697 = vld [vmem:[#allocation10 + $0x1c0] sm:$0xff]
        %v698 = vld [vmem:[#allocation10 + $0x1c8] sm:$0xff]
        %v699 = vld [vmem:[#allocation10 + $0x1d0] sm:$0xff]
        %v700 = vld [vmem:[#allocation10 + $0x1d8] sm:$0xff]
        %v701 = vld [vmem:[#allocation10 + $0x1e0] sm:$0xff]
        %v702 = vld [vmem:[#allocation10 + $0x1e8] sm:$0xff]
        %v703 = vld [vmem:[#allocation10 + $0x1f0] sm:$0xff]
        %v704 = vld [vmem:[#allocation10 + $0x1f8] sm:$0xff]
        %v705 = vld [vmem:[#allocation10 + $0x200] sm:$0xff]
        %v706 = vld [vmem:[#allocation10 + $0x208] sm:$0xff]
        %v707 = vld [vmem:[#allocation10 + $0x210] sm:$0xff]
        %v708 = vld [vmem:[#allocation10 + $0x218] sm:$0xff]
        %v709 = vld [vmem:[#allocation10 + $0x220] sm:$0xff]
        %v710 = vld [vmem:[#allocation10 + $0x228] sm:$0xff]
        %v711 = vld [vmem:[#allocation10 + $0x230] sm:$0xff]
        %v712 = vld [vmem:[#allocation10 + $0x238] sm:$0xff]
        %v713 = vld [vmem:[#allocation10 + $0x240] sm:$0xff]
        %v714 = vld [vmem:[#allocation10 + $0x248] sm:$0xff]
        %v715 = vld [vmem:[#allocation10 + $0x250] sm:$0xff]
        %v716 = vld [vmem:[#allocation10 + $0x258] sm:$0xff]
        %v717 = vld [vmem:[#allocation10 + $0x260] sm:$0xff]
        %v718 = vld [vmem:[#allocation10 + $0x268] sm:$0xff]
        %v719 = vld [vmem:[#allocation10 + $0x270] sm:$0xff]
        %v720 = vld [vmem:[#allocation10 + $0x278] sm:$0xff]
        %v721 = vld [vmem:[#allocation10 + $0x280] sm:$0xff]
        %v722 = vld [vmem:[#allocation10 + $0x288] sm:$0xff]
        %v723 = vld [vmem:[#allocation10 + $0x290] sm:$0xff]
        %v724 = vld [vmem:[#allocation10 + $0x298] sm:$0xff]
        %v725 = vld [vmem:[#allocation10 + $0x2a0] sm:$0xff]
        %v726 = vld [vmem:[#allocation10 + $0x2a8] sm:$0xff]
        %v727 = vld [vmem:[#allocation10 + $0x2b0] sm:$0xff]
        %v728 = vld [vmem:[#allocation10 + $0x2b8] sm:$0xff]
        %v729 = vld [vmem:[#allocation10 + $0x2c0] sm:$0xff]
        %v730 = vld [vmem:[#allocation10 + $0x2c8] sm:$0xff]
        %v731 = vld [vmem:[#allocation10 + $0x2d0] sm:$0xff]
        %v732 = vld [vmem:[#allocation10 + $0x2d8] sm:$0xff]
        %v733 = vld [vmem:[#allocation10 + $0x2e0] sm:$0xff]
        %v734 = vld [vmem:[#allocation10 + $0x2e8] sm:$0xff]
        %v735 = vld [vmem:[#allocation10 + $0x2f0] sm:$0xff]
        %v736 = vld [vmem:[#allocation10 + $0x2f8] sm:$0xff]
        %v737 = vld [vmem:[#allocation12] sm:$0x3f]
        %v739 = vperm.slane %v737, 0
        %v740 = vperm.slane %v737, 1
        %v741 = vperm.slane %v737, 2
        %v742 = vperm.slane %v737, 3
        %v743 = vperm.slane %v737, 4
        %v744 = vperm.slane %v737, 5
        %v753 = vunpack.c.l.b16 %v639
        %v754 = vunpack.c.h.b16 %v639
        %v755 = vunpack.c.l.b16 %v640
        %v756 = vunpack.c.h.b16 %v640
        %v757 = vpack.c.b16 %v755, %v753
        %v758 = vpack.c.b16 %v756, %v754
        %v857 = vunpack.c.l.b16 %v641
        %v858 = vunpack.c.h.b16 %v641
        %v859 = vunpack.c.l.b16 %v642
        %v860 = vunpack.c.h.b16 %v642
        %v861 = vunpack.c.l.b16 %v643
        %v862 = vunpack.c.h.b16 %v643
        %v863 = vunpack.c.l.b16 %v644
        %v864 = vunpack.c.h.b16 %v644
        %v865 = vunpack.c.l.b16 %v645
        %v866 = vunpack.c.h.b16 %v645
        %v867 = vunpack.c.l.b16 %v646
        %v868 = vunpack.c.h.b16 %v646
        %v869 = vunpack.c.l.b16 %v647
        %v870 = vunpack.c.h.b16 %v647
        %v871 = vunpack.c.l.b16 %v648
        %v872 = vunpack.c.h.b16 %v648
        %v873 = vunpack.c.l.b16 %v649
        %v874 = vunpack.c.h.b16 %v649
        %v875 = vunpack.c.l.b16 %v650
        %v876 = vunpack.c.h.b16 %v650
        %v877 = vunpack.c.l.b16 %v651
        %v878 = vunpack.c.h.b16 %v651
        %v879 = vunpack.c.l.b16 %v652
        %v880 = vunpack.c.h.b16 %v652
        %v881 = vunpack.c.l.b16 %v653
        %v882 = vunpack.c.h.b16 %v653
        %v883 = vunpack.c.l.b16 %v654
        %v884 = vunpack.c.h.b16 %v654
        %v885 = vunpack.c.l.b16 %v655
        %v886 = vunpack.c.h.b16 %v655
        %v887 = vunpack.c.l.b16 %v656
        %v888 = vunpack.c.h.b16 %v656
        %v889 = vunpack.c.l.b16 %v657
        %v890 = vunpack.c.h.b16 %v657
        %v891 = vunpack.c.l.b16 %v658
        %v892 = vunpack.c.h.b16 %v658
        %v893 = vunpack.c.l.b16 %v659
        %v894 = vunpack.c.h.b16 %v659
        %v895 = vunpack.c.l.b16 %v660
        %v896 = vunpack.c.h.b16 %v660
        %v897 = vunpack.c.l.b16 %v661
        %v898 = vunpack.c.h.b16 %v661
        %v899 = vunpack.c.l.b16 %v662
        %v900 = vunpack.c.h.b16 %v662
        %v901 = vunpack.c.l.b16 %v663
        %v902 = vunpack.c.h.b16 %v663
        %v903 = vunpack.c.l.b16 %v664
        %v904 = vunpack.c.h.b16 %v664
        %v905 = vunpack.c.l.b16 %v665
        %v906 = vunpack.c.h.b16 %v665
        %v907 = vunpack.c.l.b16 %v666
        %v908 = vunpack.c.h.b16 %v666
        %v909 = vunpack.c.l.b16 %v667
        %v910 = vunpack.c.h.b16 %v667
        %v911 = vunpack.c.l.b16 %v668
        %v912 = vunpack.c.h.b16 %v668
        %v913 = vunpack.c.l.b16 %v669
        %v914 = vunpack.c.h.b16 %v669
        %v915 = vunpack.c.l.b16 %v670
        %v916 = vunpack.c.h.b16 %v670
        %v917 = vunpack.c.l.b16 %v671
        %v918 = vunpack.c.h.b16 %v671
        %v919 = vunpack.c.l.b16 %v672
        %v920 = vunpack.c.h.b16 %v672
        %v921 = vunpack.c.l.b16 %v673
        %v922 = vunpack.c.h.b16 %v673
        %v923 = vunpack.c.l.b16 %v674
        %v924 = vunpack.c.h.b16 %v674
        %v925 = vunpack.c.l.b16 %v675
        %v926 = vunpack.c.h.b16 %v675
        %v927 = vunpack.c.l.b16 %v676
        %v928 = vunpack.c.h.b16 %v676
        %v929 = vunpack.c.l.b16 %v677
        %v930 = vunpack.c.h.b16 %v677
        %v931 = vunpack.c.l.b16 %v678
        %v932 = vunpack.c.h.b16 %v678
        %v933 = vunpack.c.l.b16 %v679
        %v934 = vunpack.c.h.b16 %v679
        %v935 = vunpack.c.l.b16 %v680
        %v936 = vunpack.c.h.b16 %v680
        %v937 = vunpack.c.l.b16 %v681
        %v938 = vunpack.c.h.b16 %v681
        %v939 = vunpack.c.l.b16 %v682
        %v940 = vunpack.c.h.b16 %v682
        %v941 = vunpack.c.l.b16 %v683
        %v942 = vunpack.c.h.b16 %v683
        %v943 = vunpack.c.l.b16 %v684
        %v944 = vunpack.c.h.b16 %v684
        %v945 = vunpack.c.l.b16 %v685
        %v946 = vunpack.c.h.b16 %v685
        %v947 = vunpack.c.l.b16 %v686
        %v948 = vunpack.c.h.b16 %v686
        %v949 = vunpack.c.l.b16 %v687
        %v950 = vunpack.c.h.b16 %v687
        %v951 = vunpack.c.l.b16 %v688
        %v952 = vunpack.c.h.b16 %v688
        %v953 = vunpack.c.l.b16 %v689
        %v954 = vunpack.c.h.b16 %v689
        %v955 = vunpack.c.l.b16 %v690
        %v956 = vunpack.c.h.b16 %v690
        %v957 = vunpack.c.l.b16 %v691
        %v958 = vunpack.c.h.b16 %v691
        %v959 = vunpack.c.l.b16 %v692
        %v960 = vunpack.c.h.b16 %v692
        %v961 = vunpack.c.l.b16 %v693
        %v962 = vunpack.c.h.b16 %v693
        %v963 = vunpack.c.l.b16 %v694
        %v964 = vunpack.c.h.b16 %v694
        %v965 = vunpack.c.l.b16 %v695
        %v966 = vunpack.c.h.b16 %v695
        %v967 = vunpack.c.l.b16 %v696
        %v968 = vunpack.c.h.b16 %v696
        %v969 = vunpack.c.l.b16 %v697
        %v970 = vunpack.c.h.b16 %v697
        %v971 = vunpack.c.l.b16 %v698
        %v972 = vunpack.c.h.b16 %v698
        %v973 = vunpack.c.l.b16 %v699
        %v974 = vunpack.c.h.b16 %v699
        %v975 = vunpack.c.l.b16 %v700
        %v976 = vunpack.c.h.b16 %v700
        %v977 = vunpack.c.l.b16 %v701
        %v978 = vunpack.c.h.b16 %v701
        %v979 = vunpack.c.l.b16 %v702
        %v980 = vunpack.c.h.b16 %v702
        %v981 = vunpack.c.l.b16 %v703
        %v982 = vunpack.c.h.b16 %v703
        %v983 = vunpack.c.l.b16 %v704
        %v984 = vunpack.c.h.b16 %v704
        %v985 = vunpack.c.l.b16 %v705
        %v986 = vunpack.c.h.b16 %v705
        %v987 = vunpack.c.l.b16 %v706
        %v988 = vunpack.c.h.b16 %v706
        %v989 = vunpack.c.l.b16 %v707
        %v990 = vunpack.c.h.b16 %v707
        %v991 = vunpack.c.l.b16 %v708
        %v992 = vunpack.c.h.b16 %v708
        %v993 = vunpack.c.l.b16 %v709
        %v994 = vunpack.c.h.b16 %v709
        %v995 = vunpack.c.l.b16 %v710
        %v996 = vunpack.c.h.b16 %v710
        %v997 = vunpack.c.l.b16 %v711
        %v998 = vunpack.c.h.b16 %v711
        %v999 = vunpack.c.l.b16 %v712
        %v1000 = vunpack.c.h.b16 %v712
        %v1001 = vunpack.c.l.b16 %v713
        %v1002 = vunpack.c.h.b16 %v713
        %v1003 = vunpack.c.l.b16 %v714
        %v1004 = vunpack.c.h.b16 %v714
        %v1005 = vunpack.c.l.b16 %v715
        %v1006 = vunpack.c.h.b16 %v715
        %v1007 = vunpack.c.l.b16 %v716
        %v1008 = vunpack.c.h.b16 %v716
        %v1009 = vunpack.c.l.b16 %v717
        %v1010 = vunpack.c.h.b16 %v717
        %v1011 = vunpack.c.l.b16 %v718
        %v1012 = vunpack.c.h.b16 %v718
        %v1013 = vunpack.c.l.b16 %v719
        %v1014 = vunpack.c.h.b16 %v719
        %v1015 = vunpack.c.l.b16 %v720
        %v1016 = vunpack.c.h.b16 %v720
        %v1017 = vunpack.c.l.b16 %v721
        %v1018 = vunpack.c.h.b16 %v721
        %v1019 = vunpack.c.l.b16 %v722
        %v1020 = vunpack.c.h.b16 %v722
        %v1021 = vunpack.c.l.b16 %v723
        %v1022 = vunpack.c.h.b16 %v723
        %v1023 = vunpack.c.l.b16 %v724
        %v1024 = vunpack.c.h.b16 %v724
        %v1025 = vunpack.c.l.b16 %v725
        %v1026 = vunpack.c.h.b16 %v725
        %v1027 = vunpack.c.l.b16 %v726
        %v1028 = vunpack.c.h.b16 %v726
        %v1029 = vunpack.c.l.b16 %v727
        %v1030 = vunpack.c.h.b16 %v727
        %v1031 = vunpack.c.l.b16 %v728
        %v1032 = vunpack.c.h.b16 %v728
        %v1033 = vunpack.c.l.b16 %v729
        %v1034 = vunpack.c.h.b16 %v729
        %v1035 = vunpack.c.l.b16 %v730
        %v1036 = vunpack.c.h.b16 %v730
        %v1037 = vunpack.c.l.b16 %v731
        %v1038 = vunpack.c.h.b16 %v731
        %v1039 = vunpack.c.l.b16 %v732
        %v1040 = vunpack.c.h.b16 %v732
        %v1041 = vunpack.c.l.b16 %v733
        %v1042 = vunpack.c.h.b16 %v733
        %v1043 = vunpack.c.l.b16 %v734
        %v1044 = vunpack.c.h.b16 %v734
        %v1045 = vunpack.c.l.b16 %v735
        %v1046 = vunpack.c.h.b16 %v735
        %v1047 = vunpack.c.l.b16 %v736
        %v1048 = vunpack.c.h.b16 %v736
        %v1049 = vpack.c.b16 %v863, %v857
        %v1050 = vpack.c.b16 %v864, %v858
        %v1051 = vpack.c.b16 %v865, %v859
        %v1052 = vpack.c.b16 %v866, %v860
        %v1053 = vpack.c.b16 %v867, %v861
        %v1054 = vpack.c.b16 %v868, %v862
        %v1055 = vpack.c.b16 %v875, %v869
        %v1056 = vpack.c.b16 %v876, %v870
        %v1057 = vpack.c.b16 %v877, %v871
        %v1058 = vpack.c.b16 %v878, %v872
        %v1059 = vpack.c.b16 %v879, %v873
        %v1060 = vpack.c.b16 %v880, %v874
        %v1061 = vpack.c.b16 %v887, %v881
        %v1062 = vpack.c.b16 %v888, %v882
        %v1063 = vpack.c.b16 %v889, %v883
        %v1064 = vpack.c.b16 %v890, %v884
        %v1065 = vpack.c.b16 %v891, %v885
        %v1066 = vpack.c.b16 %v892, %v886
        %v1067 = vpack.c.b16 %v899, %v893
        %v1068 = vpack.c.b16 %v900, %v894
        %v1069 = vpack.c.b16 %v901, %v895
        %v1070 = vpack.c.b16 %v902, %v896
        %v1071 = vpack.c.b16 %v903, %v897
        %v1072 = vpack.c.b16 %v904, %v898
        %v1073 = vpack.c.b16 %v911, %v905
        %v1074 = vpack.c.b16 %v912, %v906
        %v1075 = vpack.c.b16 %v913, %v907
        %v1076 = vpack.c.b16 %v914, %v908
        %v1077 = vpack.c.b16 %v915, %v909
        %v1078 = vpack.c.b16 %v916, %v910
        %v1079 = vpack.c.b16 %v923, %v917
        %v1080 = vpack.c.b16 %v924, %v918
        %v1081 = vpack.c.b16 %v925, %v919
        %v1082 = vpack.c.b16 %v926, %v920
        %v1083 = vpack.c.b16 %v927, %v921
        %v1084 = vpack.c.b16 %v928, %v922
        %v1085 = vpack.c.b16 %v935, %v929
        %v1086 = vpack.c.b16 %v936, %v930
        %v1087 = vpack.c.b16 %v937, %v931
        %v1088 = vpack.c.b16 %v938, %v932
        %v1089 = vpack.c.b16 %v939, %v933
        %v1090 = vpack.c.b16 %v940, %v934
        %v1091 = vpack.c.b16 %v947, %v941
        %v1092 = vpack.c.b16 %v948, %v942
        %v1093 = vpack.c.b16 %v949, %v943
        %v1094 = vpack.c.b16 %v950, %v944
        %v1095 = vpack.c.b16 %v951, %v945
        %v1096 = vpack.c.b16 %v952, %v946
        %v1097 = vpack.c.b16 %v959, %v953
        %v1098 = vpack.c.b16 %v960, %v954
        %v1099 = vpack.c.b16 %v961, %v955
        %v1100 = vpack.c.b16 %v962, %v956
        %v1101 = vpack.c.b16 %v963, %v957
        %v1102 = vpack.c.b16 %v964, %v958
        %v1103 = vpack.c.b16 %v971, %v965
        %v1104 = vpack.c.b16 %v972, %v966
        %v1105 = vpack.c.b16 %v973, %v967
        %v1106 = vpack.c.b16 %v974, %v968
        %v1107 = vpack.c.b16 %v975, %v969
        %v1108 = vpack.c.b16 %v976, %v970
        %v1109 = vpack.c.b16 %v983, %v977
        %v1110 = vpack.c.b16 %v984, %v978
        %v1111 = vpack.c.b16 %v985, %v979
        %v1112 = vpack.c.b16 %v986, %v980
        %v1113 = vpack.c.b16 %v987, %v981
        %v1114 = vpack.c.b16 %v988, %v982
        %v1115 = vpack.c.b16 %v995, %v989
        %v1116 = vpack.c.b16 %v996, %v990
        %v1117 = vpack.c.b16 %v997, %v991
        %v1118 = vpack.c.b16 %v998, %v992
        %v1119 = vpack.c.b16 %v999, %v993
        %v1120 = vpack.c.b16 %v1000, %v994
        %v1121 = vpack.c.b16 %v1007, %v1001
        %v1122 = vpack.c.b16 %v1008, %v1002
        %v1123 = vpack.c.b16 %v1009, %v1003
        %v1124 = vpack.c.b16 %v1010, %v1004
        %v1125 = vpack.c.b16 %v1011, %v1005
        %v1126 = vpack.c.b16 %v1012, %v1006
        %v1127 = vpack.c.b16 %v1019, %v1013
        %v1128 = vpack.c.b16 %v1020, %v1014
        %v1129 = vpack.c.b16 %v1021, %v1015
        %v1130 = vpack.c.b16 %v1022, %v1016
        %v1131 = vpack.c.b16 %v1023, %v1017
        %v1132 = vpack.c.b16 %v1024, %v1018
        %v1133 = vpack.c.b16 %v1031, %v1025
        %v1134 = vpack.c.b16 %v1032, %v1026
        %v1135 = vpack.c.b16 %v1033, %v1027
        %v1136 = vpack.c.b16 %v1034, %v1028
        %v1137 = vpack.c.b16 %v1035, %v1029
        %v1138 = vpack.c.b16 %v1036, %v1030
        %v1139 = vpack.c.b16 %v1043, %v1037
        %v1140 = vpack.c.b16 %v1044, %v1038
        %v1141 = vpack.c.b16 %v1045, %v1039
        %v1142 = vpack.c.b16 %v1046, %v1040
        %v1143 = vpack.c.b16 %v1047, %v1041
        %v1144 = vpack.c.b16 %v1048, %v1042
        %1241 = vmatpush.bf16.msra.mxu0 %v1091
        %1242 = vmatpush.bf16.msra.mxu0 %v1085
        %1243 = vmatpush.bf16.msra.mxu0 %v1079
        %1244 = vmatpush.bf16.msra.mxu0 %v1073
        %1245 = vmatpush.bf16.msra.mxu0 %v1067
        %1246 = vmatpush.bf16.msra.mxu0 %v1061
        %1247 = vmatpush.bf16.msra.mxu0 %v1055
        %1248 = vmatpush.bf16.msra.mxu0 %v1049
        %1249 = vmatmul.bf16.gmra.mxu0 %v757
        %v1250 = vpop.f32.mrf.mxu0
        %v1251 = vadd.f32 %v739, %v1250
        %v1252 = vpop.f32.mrf.mxu0
        %v1253 = vadd.f32 %v739, %v1252
        %1254 = vdwg.mxu0
        %1255 = vmatpush.bf16.msra.mxu0 %v1139
        %1256 = vmatpush.bf16.msra.mxu0 %v1133
        %1257 = vmatpush.bf16.msra.mxu0 %v1127
        %1258 = vmatpush.bf16.msra.mxu0 %v1121
        %1259 = vmatpush.bf16.msra.mxu0 %v1115
        %1260 = vmatpush.bf16.msra.mxu0 %v1109
        %1261 = vmatpush.bf16.msra.mxu0 %v1103
        %1262 = vmatpush.bf16.msra.mxu0 %v1097
        %1263 = vmatmul.bf16.gmra.mxu0 %v758
        %v1264 = vpop.f32.mrf.mxu0
        %v1265 = vadd.f32 %v1251, %v1264
        %v1266 = vpop.f32.mrf.mxu0
        %v1267 = vadd.f32 %v1253, %v1266
        %1268 = vdwg.mxu0
        %1269 = vmatpush.bf16.msra.mxu0 %v1092
        %1270 = vmatpush.bf16.msra.mxu0 %v1086
        %1271 = vmatpush.bf16.msra.mxu0 %v1080
        %1272 = vmatpush.bf16.msra.mxu0 %v1074
        %1273 = vmatpush.bf16.msra.mxu0 %v1068
        %1274 = vmatpush.bf16.msra.mxu0 %v1062
        %1275 = vmatpush.bf16.msra.mxu0 %v1056
        %1276 = vmatpush.bf16.msra.mxu0 %v1050
        %1277 = vmatmul.bf16.gmra.mxu0 %v757
        %v1278 = vpop.f32.mrf.mxu0
        %v1279 = vadd.f32 %v740, %v1278
        %v1280 = vpop.f32.mrf.mxu0
        %v1281 = vadd.f32 %v740, %v1280
        %1282 = vdwg.mxu0
        %1283 = vmatpush.bf16.msra.mxu0 %v1140
        %1284 = vmatpush.bf16.msra.mxu0 %v1134
        %1285 = vmatpush.bf16.msra.mxu0 %v1128
        %1286 = vmatpush.bf16.msra.mxu0 %v1122
        %1287 = vmatpush.bf16.msra.mxu0 %v1116
        %1288 = vmatpush.bf16.msra.mxu0 %v1110
        %1289 = vmatpush.bf16.msra.mxu0 %v1104
        %1290 = vmatpush.bf16.msra.mxu0 %v1098
        %1291 = vmatmul.bf16.gmra.mxu0 %v758
        %v1292 = vpop.f32.mrf.mxu0
        %v1293 = vadd.f32 %v1279, %v1292
        %v1294 = vpop.f32.mrf.mxu0
        %v1295 = vadd.f32 %v1281, %v1294
        %1296 = vdwg.mxu0
        %1297 = vmatpush.bf16.msra.mxu0 %v1093
        %1298 = vmatpush.bf16.msra.mxu0 %v1087
        %1299 = vmatpush.bf16.msra.mxu0 %v1081
        %1300 = vmatpush.bf16.msra.mxu0 %v1075
        %1301 = vmatpush.bf16.msra.mxu0 %v1069
        %1302 = vmatpush.bf16.msra.mxu0 %v1063
        %1303 = vmatpush.bf16.msra.mxu0 %v1057
        %1304 = vmatpush.bf16.msra.mxu0 %v1051
        %1305 = vmatmul.bf16.gmra.mxu0 %v757
        %v1306 = vpop.f32.mrf.mxu0
        %v1307 = vadd.f32 %v741, %v1306
        %v1308 = vpop.f32.mrf.mxu0
        %v1309 = vadd.f32 %v741, %v1308
        %1310 = vdwg.mxu0
        %1311 = vmatpush.bf16.msra.mxu0 %v1141
        %1312 = vmatpush.bf16.msra.mxu0 %v1135
        %1313 = vmatpush.bf16.msra.mxu0 %v1129
        %1314 = vmatpush.bf16.msra.mxu0 %v1123
        %1315 = vmatpush.bf16.msra.mxu0 %v1117
        %1316 = vmatpush.bf16.msra.mxu0 %v1111
        %1317 = vmatpush.bf16.msra.mxu0 %v1105
        %1318 = vmatpush.bf16.msra.mxu0 %v1099
        %1319 = vmatmul.bf16.gmra.mxu0 %v758
        %v1320 = vpop.f32.mrf.mxu0
        %v1321 = vadd.f32 %v1307, %v1320
        %v1322 = vpop.f32.mrf.mxu0
        %v1323 = vadd.f32 %v1309, %v1322
        %1324 = vdwg.mxu0
        %1325 = vmatpush.bf16.msra.mxu0 %v1094
        %1326 = vmatpush.bf16.msra.mxu0 %v1088
        %1327 = vmatpush.bf16.msra.mxu0 %v1082
        %1328 = vmatpush.bf16.msra.mxu0 %v1076
        %1329 = vmatpush.bf16.msra.mxu0 %v1070
        %1330 = vmatpush.bf16.msra.mxu0 %v1064
        %1331 = vmatpush.bf16.msra.mxu0 %v1058
        %1332 = vmatpush.bf16.msra.mxu0 %v1052
        %1333 = vmatmul.bf16.gmra.mxu0 %v757
        %v1334 = vpop.f32.mrf.mxu0
        %v1335 = vadd.f32 %v742, %v1334
        %v1336 = vpop.f32.mrf.mxu0
        %v1337 = vadd.f32 %v742, %v1336
        %1338 = vdwg.mxu0
        %1339 = vmatpush.bf16.msra.mxu0 %v1142
        %1340 = vmatpush.bf16.msra.mxu0 %v1136
        %1341 = vmatpush.bf16.msra.mxu0 %v1130
        %1342 = vmatpush.bf16.msra.mxu0 %v1124
        %1343 = vmatpush.bf16.msra.mxu0 %v1118
        %1344 = vmatpush.bf16.msra.mxu0 %v1112
        %1345 = vmatpush.bf16.msra.mxu0 %v1106
        %1346 = vmatpush.bf16.msra.mxu0 %v1100
        %1347 = vmatmul.bf16.gmra.mxu0 %v758
        %v1348 = vpop.f32.mrf.mxu0
        %v1349 = vadd.f32 %v1335, %v1348
        %v1350 = vpop.f32.mrf.mxu0
        %v1351 = vadd.f32 %v1337, %v1350
        %1352 = vdwg.mxu0
        %1353 = vmatpush.bf16.msra.mxu0 %v1095
        %1354 = vmatpush.bf16.msra.mxu0 %v1089
        %1355 = vmatpush.bf16.msra.mxu0 %v1083
        %1356 = vmatpush.bf16.msra.mxu0 %v1077
        %1357 = vmatpush.bf16.msra.mxu0 %v1071
        %1358 = vmatpush.bf16.msra.mxu0 %v1065
        %1359 = vmatpush.bf16.msra.mxu0 %v1059
        %1360 = vmatpush.bf16.msra.mxu0 %v1053
        %1361 = vmatmul.bf16.gmra.mxu0 %v757
        %v1362 = vpop.f32.mrf.mxu0
        %v1363 = vadd.f32 %v743, %v1362
        %v1364 = vpop.f32.mrf.mxu0
        %v1365 = vadd.f32 %v743, %v1364
        %1366 = vdwg.mxu0
        %1367 = vmatpush.bf16.msra.mxu0 %v1143
        %1368 = vmatpush.bf16.msra.mxu0 %v1137
        %1369 = vmatpush.bf16.msra.mxu0 %v1131
        %1370 = vmatpush.bf16.msra.mxu0 %v1125
        %1371 = vmatpush.bf16.msra.mxu0 %v1119
        %1372 = vmatpush.bf16.msra.mxu0 %v1113
        %1373 = vmatpush.bf16.msra.mxu0 %v1107
        %1374 = vmatpush.bf16.msra.mxu0 %v1101
        %1375 = vmatmul.bf16.gmra.mxu0 %v758
        %v1376 = vpop.f32.mrf.mxu0
        %v1377 = vadd.f32 %v1363, %v1376
        %v1378 = vpop.f32.mrf.mxu0
        %v1379 = vadd.f32 %v1365, %v1378
        %1380 = vdwg.mxu0
        %1381 = vmatpush.bf16.msra.mxu0 %v1096
        %1382 = vmatpush.bf16.msra.mxu0 %v1090
        %1383 = vmatpush.bf16.msra.mxu0 %v1084
        %1384 = vmatpush.bf16.msra.mxu0 %v1078
        %1385 = vmatpush.bf16.msra.mxu0 %v1072
        %1386 = vmatpush.bf16.msra.mxu0 %v1066
        %1387 = vmatpush.bf16.msra.mxu0 %v1060
        %1388 = vmatpush.bf16.msra.mxu0 %v1054
        %1389 = vmatmul.bf16.gmra.mxu0 %v757
        %v1390 = vpop.f32.mrf.mxu0
        %v1391 = vadd.f32 %v744, %v1390
        %v1392 = vpop.f32.mrf.mxu0
        %v1393 = vadd.f32 %v744, %v1392
        %1394 = vdwg.mxu0
        %1395 = vmatpush.bf16.msra.mxu0 %v1144
        %1396 = vmatpush.bf16.msra.mxu0 %v1138
        %1397 = vmatpush.bf16.msra.mxu0 %v1132
        %1398 = vmatpush.bf16.msra.mxu0 %v1126
        %1399 = vmatpush.bf16.msra.mxu0 %v1120
        %1400 = vmatpush.bf16.msra.mxu0 %v1114
        %1401 = vmatpush.bf16.msra.mxu0 %v1108
        %1402 = vmatpush.bf16.msra.mxu0 %v1102
        %1403 = vmatmul.bf16.gmra.mxu0 %v758
        %v1404 = vpop.f32.mrf.mxu0
        %v1405 = vadd.f32 %v1391, %v1404
        %v1406 = vpop.f32.mrf.mxu0
        %v1407 = vadd.f32 %v1393, %v1406
        %1408 = vdwg.mxu0
        %v1409 = vpack.c.bf16 %v1295, %v1293
        %v1410 = vpack.c.bf16 %v1323, %v1321
        %v1411 = vld [vmem:[#allocation7] sm:$0xf]
        %v1412 = vld [vmem:[#allocation7 + $0x8] sm:$0xf]
        %v1413 = vld [vmem:[#allocation7 + $0x10] sm:$0xf]
        %v1414 = vld [vmem:[#allocation7 + $0x18] sm:$0xf]
        %v1415 = vld [vmem:[#allocation7 + $0x20] sm:$0xf]
        %v1416 = vld [vmem:[#allocation7 + $0x28] sm:$0xf]
        %v1417 = vld [vmem:[#allocation7 + $0x30] sm:$0xf]
        %v1418 = vld [vmem:[#allocation7 + $0x38] sm:$0xf]
        %v1419 = vld [vmem:[#allocation7 + $0x40] sm:$0xf]
        %v1420 = vld [vmem:[#allocation7 + $0x48] sm:$0xf]
        %v1421 = vld [vmem:[#allocation7 + $0x50] sm:$0xf]
        %v1422 = vld [vmem:[#allocation7 + $0x58] sm:$0xf]
        %v1423 = vld [vmem:[#allocation7 + $0x60] sm:$0xf]
        %v1424 = vld [vmem:[#allocation7 + $0x68] sm:$0xf]
        %v1425 = vld [vmem:[#allocation7 + $0x70] sm:$0xf]
        %v1426 = vld [vmem:[#allocation7 + $0x78] sm:$0xf]
        %v1427 = vld [vmem:[%s537] sm:$0x1]
        %v1428 = vld [vmem:[%s542] sm:$0x1]
        %v1430 = vperm.slane %v1427, 0
        %v1432 = vadd.f32 %v1265, %v1430
        %v1433 = vadd.f32 %v1267, %v1430
        %v1434 = vpack.c.bf16 %v1433, %v1432
        %v1436 = vperm.slane %v1428, 0
        %v1438 = vadd.f32 %v1265, %v1436
        %v1439 = vadd.f32 %v1267, %v1436
        %v1440 = vpack.c.bf16 %v1439, %v1438
        %v1457 = vunpack.c.l.b16 %v1411
        %v1458 = vunpack.c.l.b16 %v1412
        %v1459 = vunpack.c.l.b16 %v1413
        %v1460 = vunpack.c.l.b16 %v1414
        %v1461 = vunpack.c.l.b16 %v1415
        %v1462 = vunpack.c.l.b16 %v1416
        %v1463 = vunpack.c.l.b16 %v1417
        %v1464 = vunpack.c.l.b16 %v1418
        %v1465 = vunpack.c.l.b16 %v1419
        %v1466 = vunpack.c.l.b16 %v1420
        %v1467 = vunpack.c.l.b16 %v1421
        %v1468 = vunpack.c.l.b16 %v1422
        %v1469 = vunpack.c.l.b16 %v1423
        %v1470 = vunpack.c.l.b16 %v1424
        %v1471 = vunpack.c.l.b16 %v1425
        %v1472 = vunpack.c.l.b16 %v1426
        %v1473 = vpack.c.b16 %v1458, %v1457
        %v1474 = vpack.c.b16 %v1460, %v1459
        %v1475 = vpack.c.b16 %v1462, %v1461
        %v1476 = vpack.c.b16 %v1464, %v1463
        %v1477 = vpack.c.b16 %v1466, %v1465
        %v1478 = vpack.c.b16 %v1468, %v1467
        %v1479 = vpack.c.b16 %v1470, %v1469
        %v1480 = vpack.c.b16 %v1472, %v1471
        %1489 = vmatpush.bf16.xpose.msra.mxu0 %v1480
        %1490 = vmatpush.bf16.xpose.msra.mxu0 %v1479
        %1491 = vmatpush.bf16.xpose.msra.mxu0 %v1478
        %1492 = vmatpush.bf16.xpose.msra.mxu0 %v1477
        %1493 = vmatpush.bf16.xpose.msra.mxu0 %v1476
        %1494 = vmatpush.bf16.xpose.msra.mxu0 %v1475
        %1495 = vmatpush.bf16.xpose.msra.mxu0 %v1474
        %1496 = vmatpush.bf16.xpose.msra.mxu0 %v1473
        %1497 = vmatmul.bf16.gmra.mxu0 %v1440
        %v1498 = vpop.f32.mrf.mxu0
        %v1499 = vadd.f32 0.0, %v1498
        %v1500 = vpop.f32.mrf.mxu0
        %v1501 = vadd.f32 0.0, %v1500
        %1502 = vdwg.mxu0
        %1504 = vrot.lane.b32.xlu0 %v1499, 256
        %v1505 = vpop.permute.xlu0 %1504
        %s1507 = sor.u32 256, 8
        %1508 = vrot.lane.b32.xlu0 %v1501, %s1507
        %v1509 = vpop.permute.xlu0 %1508
        %1510 = vmatpush.bf16.xpose.msra.mxu0 0
        %1511 = vmatpush.bf16.xpose.msra.mxu0 0
        %1512 = vmatpush.bf16.xpose.msra.mxu0 0
        %1513 = vmatpush.bf16.xpose.msra.mxu0 0
        %1514 = vmatpush.bf16.xpose.msra.mxu0 0
        %1515 = vmatpush.bf16.xpose.msra.mxu0 0
        %1516 = vmatpush.bf16.xpose.msra.mxu0 0
        %1517 = vmatpush.bf16.xpose.msra.mxu0 %v1409
        %1518 = vmatmul.bf16.gmra.mxu0 %v1434
        %v1519 = vpop.f32.mrf.mxu0
        %v1520 = vadd.f32 %v1505, %v1519
        %v1521 = vpop.f32.mrf.mxu0
        %v1522 = vadd.f32 %v1509, %v1521
        %1523 = vdwg.mxu0
        %v1524 = vmul.f32 %v1520, 0.0625
        %v1525 = vmul.f32 %v1522, 0.0625
        %vm1526 = vcmask 130048
        %v1527 = vsel %vm1526, %v1524, -inf
        %1528 = vmax.xlane.f32.xlu0 %v1527
        %v1529 = vpop.xlane.xlu0 %1528
        %v1530 = vsel %vm1526, %v1525, -inf
        %1531 = vmax.xlane.f32.xlu0 %v1530
        %v1532 = vpop.xlane.xlu0 %1531
        %v1533 = vsub.f32 %v1524, %v1529
        %v1534 = vsub.f32 %v1525, %v1532
        %v1535 = vmul.f32 %v1533, 1.442695
        %v1536 = vpow.pop %v1535
        %v1537 = vmul.f32 %v1534, 1.442695
        %v1538 = vpow.pop %v1537
        %v1539 = vsel %vm1526, %v1536, 0.0
        %1540 = vadd.xlane.f32.xlu0 %v1539
        %v1541 = vpop.xlane.xlu0 %1540
        %v1542 = vsel %vm1526, %v1538, 0.0
        %1543 = vadd.xlane.f32.xlu0 %v1542
        %v1544 = vpop.xlane.xlu0 %1543
        %v1545 = vrcp.pop %v1541
        %v1546 = vrcp.pop %v1544
        %v1547 = vmul.f32 %v1536, %v1545
        %v1548 = vmul.f32 %v1538, %v1546
        %v1549 = vpack.c.bf16 %v1548, %v1547
        %v1551 = vsel %vm1526, %v1549, 0
        %1553 = vmatpush.bf16.msra.mxu0 0
        %1554 = vmatpush.bf16.msra.mxu0 0
        %1555 = vmatpush.bf16.msra.mxu0 0
        %1556 = vmatpush.bf16.msra.mxu0 0
        %1557 = vmatpush.bf16.msra.mxu0 0
        %1558 = vmatpush.bf16.msra.mxu0 0
        %1559 = vmatpush.bf16.msra.mxu0 0
        %1560 = vmatpush.bf16.msra.mxu0 %v1410
        %1561 = vmatmul.bf16.gmra.mxu0 %v1551
        %v1562 = vpop.f32.mrf.mxu0
        %v1563 = vadd.f32 0.0, %v1562
        %v1564 = vpop.f32.mrf.mxu0
        %v1565 = vadd.f32 0.0, %v1564
        %1566 = vdwg.mxu0
        %v1567 = vld [vmem:[#allocation2] sm:$0xff]
        %v1568 = vld [vmem:[#allocation2 + $0x8] sm:$0xff]
        %v1569 = vld [vmem:[#allocation2 + $0x10] sm:$0xff]
        %v1570 = vld [vmem:[#allocation2 + $0x18] sm:$0xff]
        %v1571 = vpack.c.bf16 %v1565, %v1563
        %v1572 = vld [vmem:[#allocation13] sm:$0xff]
        %v1573 = vld [vmem:[#allocation13 + $0x8] sm:$0xff]
        %v1574 = vld [vmem:[#allocation13 + $0x10] sm:$0xff]
        %v1575 = vld [vmem:[#allocation13 + $0x18] sm:$0xff]
        %v1576 = vld [vmem:[#allocation13 + $0x20] sm:$0xff]
        %v1577 = vld [vmem:[#allocation13 + $0x28] sm:$0xff]
        %v1578 = vld [vmem:[#allocation13 + $0x30] sm:$0xff]
        %v1579 = vld [vmem:[#allocation13 + $0x38] sm:$0xff]
        %v1580 = vld [vmem:[#allocation13 + $0x40] sm:$0xff]
        %v1581 = vld [vmem:[#allocation13 + $0x48] sm:$0xff]
        %v1582 = vld [vmem:[#allocation13 + $0x50] sm:$0xff]
        %v1583 = vld [vmem:[#allocation13 + $0x58] sm:$0xff]
        %v1584 = vld [vmem:[#allocation13 + $0x60] sm:$0xff]
        %v1585 = vld [vmem:[#allocation13 + $0x68] sm:$0xff]
        %v1586 = vld [vmem:[#allocation13 + $0x70] sm:$0xff]
        %v1587 = vld [vmem:[#allocation13 + $0x78] sm:$0xff]
        %v1604 = vunpack.c.l.b16 %v1572
        %v1605 = vunpack.c.h.b16 %v1572
        %v1606 = vunpack.c.l.b16 %v1573
        %v1607 = vunpack.c.h.b16 %v1573
        %v1608 = vunpack.c.l.b16 %v1574
        %v1609 = vunpack.c.h.b16 %v1574
        %v1610 = vunpack.c.l.b16 %v1575
        %v1611 = vunpack.c.h.b16 %v1575
        %v1612 = vunpack.c.l.b16 %v1576
        %v1613 = vunpack.c.h.b16 %v1576
        %v1614 = vunpack.c.l.b16 %v1577
        %v1615 = vunpack.c.h.b16 %v1577
        %v1616 = vunpack.c.l.b16 %v1578
        %v1617 = vunpack.c.h.b16 %v1578
        %v1618 = vunpack.c.l.b16 %v1579
        %v1619 = vunpack.c.h.b16 %v1579
        %v1620 = vunpack.c.l.b16 %v1580
        %v1621 = vunpack.c.h.b16 %v1580
        %v1622 = vunpack.c.l.b16 %v1581
        %v1623 = vunpack.c.h.b16 %v1581
        %v1624 = vunpack.c.l.b16 %v1582
        %v1625 = vunpack.c.h.b16 %v1582
        %v1626 = vunpack.c.l.b16 %v1583
        %v1627 = vunpack.c.h.b16 %v1583
        %v1628 = vunpack.c.l.b16 %v1584
        %v1629 = vunpack.c.h.b16 %v1584
        %v1630 = vunpack.c.l.b16 %v1585
        %v1631 = vunpack.c.h.b16 %v1585
        %v1632 = vunpack.c.l.b16 %v1586
        %v1633 = vunpack.c.h.b16 %v1586
        %v1634 = vunpack.c.l.b16 %v1587
        %v1635 = vunpack.c.h.b16 %v1587
        %v1636 = vpack.c.b16 %v1606, %v1604
        %v1637 = vpack.c.b16 %v1607, %v1605
        %v1638 = vpack.c.b16 %v1610, %v1608
        %v1639 = vpack.c.b16 %v1611, %v1609
        %v1640 = vpack.c.b16 %v1614, %v1612
        %v1641 = vpack.c.b16 %v1615, %v1613
        %v1642 = vpack.c.b16 %v1618, %v1616
        %v1643 = vpack.c.b16 %v1619, %v1617
        %v1644 = vpack.c.b16 %v1622, %v1620
        %v1645 = vpack.c.b16 %v1623, %v1621
        %v1646 = vpack.c.b16 %v1626, %v1624
        %v1647 = vpack.c.b16 %v1627, %v1625
        %v1648 = vpack.c.b16 %v1630, %v1628
        %v1649 = vpack.c.b16 %v1631, %v1629
        %v1650 = vpack.c.b16 %v1634, %v1632
        %v1651 = vpack.c.b16 %v1635, %v1633
        %1668 = vmatpush.bf16.msra.mxu0 %v1650
        %1669 = vmatpush.bf16.msra.mxu0 %v1648
        %1670 = vmatpush.bf16.msra.mxu0 %v1646
        %1671 = vmatpush.bf16.msra.mxu0 %v1644
        %1672 = vmatpush.bf16.msra.mxu0 %v1642
        %1673 = vmatpush.bf16.msra.mxu0 %v1640
        %1674 = vmatpush.bf16.msra.mxu0 %v1638
        %1675 = vmatpush.bf16.msra.mxu0 %v1636
        %1676 = vmatmul.bf16.gmra.mxu0 %v1571
        %v1677 = vpop.f32.mrf.mxu0
        %v1678 = vadd.f32 0.0, %v1677
        %v1679 = vpop.f32.mrf.mxu0
        %v1680 = vadd.f32 0.0, %v1679
        %1681 = vdwg.mxu0
        %1682 = vmatpush.bf16.msra.mxu0 %v1651
        %1683 = vmatpush.bf16.msra.mxu0 %v1649
        %1684 = vmatpush.bf16.msra.mxu0 %v1647
        %1685 = vmatpush.bf16.msra.mxu0 %v1645
        %1686 = vmatpush.bf16.msra.mxu0 %v1643
        %1687 = vmatpush.bf16.msra.mxu0 %v1641
        %1688 = vmatpush.bf16.msra.mxu0 %v1639
        %1689 = vmatpush.bf16.msra.mxu0 %v1637
        %1690 = vmatmul.bf16.gmra.mxu0 %v1571
        %v1691 = vpop.f32.mrf.mxu0
        %v1692 = vadd.f32 0.0, %v1691
        %v1693 = vpop.f32.mrf.mxu0
        %v1694 = vadd.f32 0.0, %v1693
        %1695 = vdwg.mxu0
        %v1696 = vadd.f32 %v1567, %v1678
        %v1697 = vadd.f32 %v1568, %v1692
        %v1698 = vadd.f32 %v1569, %v1680
        %v1699 = vadd.f32 %v1570, %v1694
        %1700 = vst [vmem:[#allocation2] sm:$0xff] %v1696
        %1701 = vst [vmem:[#allocation2 + $0x8] sm:$0xff] %v1697
        %1702 = vst [vmem:[#allocation2 + $0x10] sm:$0xff] %v1698
        %1703 = vst [vmem:[#allocation2 + $0x18] sm:$0xff] %v1699
        %v1704 = vpack.c.bf16 %v1379, %v1377
        %v1705 = vpack.c.bf16 %v1407, %v1405
        %v1706 = vld [vmem:[#allocation7 + $0x4] sm:$0xf]
        %v1707 = vld [vmem:[#allocation7 + $0xc] sm:$0xf]
        %v1708 = vld [vmem:[#allocation7 + $0x14] sm:$0xf]
        %v1709 = vld [vmem:[#allocation7 + $0x1c] sm:$0xf]
        %v1710 = vld [vmem:[#allocation7 + $0x24] sm:$0xf]
        %v1711 = vld [vmem:[#allocation7 + $0x2c] sm:$0xf]
        %v1712 = vld [vmem:[#allocation7 + $0x34] sm:$0xf]
        %v1713 = vld [vmem:[#allocation7 + $0x3c] sm:$0xf]
        %v1714 = vld [vmem:[#allocation7 + $0x44] sm:$0xf]
        %v1715 = vld [vmem:[#allocation7 + $0x4c] sm:$0xf]
        %v1716 = vld [vmem:[#allocation7 + $0x54] sm:$0xf]
        %v1717 = vld [vmem:[#allocation7 + $0x5c] sm:$0xf]
        %v1718 = vld [vmem:[#allocation7 + $0x64] sm:$0xf]
        %v1719 = vld [vmem:[#allocation7 + $0x6c] sm:$0xf]
        %v1720 = vld [vmem:[#allocation7 + $0x74] sm:$0xf]
        %v1721 = vld [vmem:[#allocation7 + $0x7c] sm:$0xf]
        %v1722 = vld [vmem:[%s537 + $0x1] sm:$0x1]
        %v1723 = vld [vmem:[%s542 + $0x1] sm:$0x1]
        %v1725 = vperm.slane %v1722, 0
        %v1727 = vadd.f32 %v1349, %v1725
        %v1728 = vadd.f32 %v1351, %v1725
        %v1729 = vpack.c.bf16 %v1728, %v1727
        %v1731 = vperm.slane %v1723, 0
        %v1733 = vadd.f32 %v1349, %v1731
        %v1734 = vadd.f32 %v1351, %v1731
        %v1735 = vpack.c.bf16 %v1734, %v1733
        %v1752 = vunpack.c.l.b16 %v1706
        %v1753 = vunpack.c.l.b16 %v1707
        %v1754 = vunpack.c.l.b16 %v1708
        %v1755 = vunpack.c.l.b16 %v1709
        %v1756 = vunpack.c.l.b16 %v1710
        %v1757 = vunpack.c.l.b16 %v1711
        %v1758 = vunpack.c.l.b16 %v1712
        %v1759 = vunpack.c.l.b16 %v1713
        %v1760 = vunpack.c.l.b16 %v1714
        %v1761 = vunpack.c.l.b16 %v1715
        %v1762 = vunpack.c.l.b16 %v1716
        %v1763 = vunpack.c.l.b16 %v1717
        %v1764 = vunpack.c.l.b16 %v1718
        %v1765 = vunpack.c.l.b16 %v1719
        %v1766 = vunpack.c.l.b16 %v1720
        %v1767 = vunpack.c.l.b16 %v1721
        %v1768 = vpack.c.b16 %v1753, %v1752
        %v1769 = vpack.c.b16 %v1755, %v1754
        %v1770 = vpack.c.b16 %v1757, %v1756
        %v1771 = vpack.c.b16 %v1759, %v1758
        %v1772 = vpack.c.b16 %v1761, %v1760
        %v1773 = vpack.c.b16 %v1763, %v1762
        %v1774 = vpack.c.b16 %v1765, %v1764
        %v1775 = vpack.c.b16 %v1767, %v1766
        %1784 = vmatpush.bf16.xpose.msra.mxu0 %v1775
        %1785 = vmatpush.bf16.xpose.msra.mxu0 %v1774
        %1786 = vmatpush.bf16.xpose.msra.mxu0 %v1773
        %1787 = vmatpush.bf16.xpose.msra.mxu0 %v1772
        %1788 = vmatpush.bf16.xpose.msra.mxu0 %v1771
        %1789 = vmatpush.bf16.xpose.msra.mxu0 %v1770
        %1790 = vmatpush.bf16.xpose.msra.mxu0 %v1769
        %1791 = vmatpush.bf16.xpose.msra.mxu0 %v1768
        %1792 = vmatmul.bf16.gmra.mxu0 %v1735
        %v1793 = vpop.f32.mrf.mxu0
        %v1794 = vadd.f32 0.0, %v1793
        %v1795 = vpop.f32.mrf.mxu0
        %v1796 = vadd.f32 0.0, %v1795
        %1797 = vdwg.mxu0
        %1799 = vrot.lane.b32.xlu0 %v1794, 256
        %v1800 = vpop.permute.xlu0 %1799
        %s1802 = sor.u32 256, 8
        %1803 = vrot.lane.b32.xlu0 %v1796, %s1802
        %v1804 = vpop.permute.xlu0 %1803
        %1805 = vmatpush.bf16.xpose.msra.mxu0 0
        %1806 = vmatpush.bf16.xpose.msra.mxu0 0
        %1807 = vmatpush.bf16.xpose.msra.mxu0 0
        %1808 = vmatpush.bf16.xpose.msra.mxu0 0
        %1809 = vmatpush.bf16.xpose.msra.mxu0 0
        %1810 = vmatpush.bf16.xpose.msra.mxu0 0
        %1811 = vmatpush.bf16.xpose.msra.mxu0 0
        %1812 = vmatpush.bf16.xpose.msra.mxu0 %v1704
        %1813 = vmatmul.bf16.gmra.mxu0 %v1729
        %v1814 = vpop.f32.mrf.mxu0
        %v1815 = vadd.f32 %v1800, %v1814
        %v1816 = vpop.f32.mrf.mxu0
        %v1817 = vadd.f32 %v1804, %v1816
        %1818 = vdwg.mxu0
        %v1819 = vmul.f32 %v1815, 0.0625
        %v1820 = vmul.f32 %v1817, 0.0625
        %v1821 = vsel %vm1526, %v1819, -inf
        %1822 = vmax.xlane.f32.xlu0 %v1821
        %v1823 = vpop.xlane.xlu0 %1822
        %v1824 = vsel %vm1526, %v1820, -inf
        %1825 = vmax.xlane.f32.xlu0 %v1824
        %v1826 = vpop.xlane.xlu0 %1825
        %v1827 = vsub.f32 %v1819, %v1823
        %v1828 = vsub.f32 %v1820, %v1826
        %v1829 = vmul.f32 %v1827, 1.442695
        %v1830 = vpow.pop %v1829
        %v1831 = vmul.f32 %v1828, 1.442695
        %v1832 = vpow.pop %v1831
        %v1833 = vsel %vm1526, %v1830, 0.0
        %1834 = vadd.xlane.f32.xlu0 %v1833
        %v1835 = vpop.xlane.xlu0 %1834
        %v1836 = vsel %vm1526, %v1832, 0.0
        %1837 = vadd.xlane.f32.xlu0 %v1836
        %v1838 = vpop.xlane.xlu0 %1837
        %v1839 = vrcp.pop %v1835
        %v1840 = vrcp.pop %v1838
        %v1841 = vmul.f32 %v1830, %v1839
        %v1842 = vmul.f32 %v1832, %v1840
        %v1843 = vpack.c.bf16 %v1842, %v1841
        %v1845 = vsel %vm1526, %v1843, 0
        %1847 = vmatpush.bf16.msra.mxu0 0
        %1848 = vmatpush.bf16.msra.mxu0 0
        %1849 = vmatpush.bf16.msra.mxu0 0
        %1850 = vmatpush.bf16.msra.mxu0 0
        %1851 = vmatpush.bf16.msra.mxu0 0
        %1852 = vmatpush.bf16.msra.mxu0 0
        %1853 = vmatpush.bf16.msra.mxu0 0
        %1854 = vmatpush.bf16.msra.mxu0 %v1705
        %1855 = vmatmul.bf16.gmra.mxu0 %v1845
        %v1856 = vpop.f32.mrf.mxu0
        %v1857 = vadd.f32 0.0, %v1856
        %v1858 = vpop.f32.mrf.mxu0
        %v1859 = vadd.f32 0.0, %v1858
        %1860 = vdwg.mxu0
        %v1861 = vld [vmem:[#allocation2] sm:$0xff]
        %v1862 = vld [vmem:[#allocation2 + $0x8] sm:$0xff]
        %v1863 = vld [vmem:[#allocation2 + $0x10] sm:$0xff]
        %v1864 = vld [vmem:[#allocation2 + $0x18] sm:$0xff]
        %v1865 = vpack.c.bf16 %v1859, %v1857
        %v1866 = vld [vmem:[#allocation13 + $0x80] sm:$0xff]
        %v1867 = vld [vmem:[#allocation13 + $0x88] sm:$0xff]
        %v1868 = vld [vmem:[#allocation13 + $0x90] sm:$0xff]
        %v1869 = vld [vmem:[#allocation13 + $0x98] sm:$0xff]
        %v1870 = vld [vmem:[#allocation13 + $0xa0] sm:$0xff]
        %v1871 = vld [vmem:[#allocation13 + $0xa8] sm:$0xff]
        %v1872 = vld [vmem:[#allocation13 + $0xb0] sm:$0xff]
        %v1873 = vld [vmem:[#allocation13 + $0xb8] sm:$0xff]
        %v1874 = vld [vmem:[#allocation13 + $0xc0] sm:$0xff]
        %v1875 = vld [vmem:[#allocation13 + $0xc8] sm:$0xff]
        %v1876 = vld [vmem:[#allocation13 + $0xd0] sm:$0xff]
        %v1877 = vld [vmem:[#allocation13 + $0xd8] sm:$0xff]
        %v1878 = vld [vmem:[#allocation13 + $0xe0] sm:$0xff]
        %v1879 = vld [vmem:[#allocation13 + $0xe8] sm:$0xff]
        %v1880 = vld [vmem:[#allocation13 + $0xf0] sm:$0xff]
        %v1881 = vld [vmem:[#allocation13 + $0xf8] sm:$0xff]
        %v1898 = vunpack.c.l.b16 %v1866
        %v1899 = vunpack.c.h.b16 %v1866
        %v1900 = vunpack.c.l.b16 %v1867
        %v1901 = vunpack.c.h.b16 %v1867
        %v1902 = vunpack.c.l.b16 %v1868
        %v1903 = vunpack.c.h.b16 %v1868
        %v1904 = vunpack.c.l.b16 %v1869
        %v1905 = vunpack.c.h.b16 %v1869
        %v1906 = vunpack.c.l.b16 %v1870
        %v1907 = vunpack.c.h.b16 %v1870
        %v1908 = vunpack.c.l.b16 %v1871
        %v1909 = vunpack.c.h.b16 %v1871
        %v1910 = vunpack.c.l.b16 %v1872
        %v1911 = vunpack.c.h.b16 %v1872
        %v1912 = vunpack.c.l.b16 %v1873
        %v1913 = vunpack.c.h.b16 %v1873
        %v1914 = vunpack.c.l.b16 %v1874
        %v1915 = vunpack.c.h.b16 %v1874
        %v1916 = vunpack.c.l.b16 %v1875
        %v1917 = vunpack.c.h.b16 %v1875
        %v1918 = vunpack.c.l.b16 %v1876
        %v1919 = vunpack.c.h.b16 %v1876
        %v1920 = vunpack.c.l.b16 %v1877
        %v1921 = vunpack.c.h.b16 %v1877
        %v1922 = vunpack.c.l.b16 %v1878
        %v1923 = vunpack.c.h.b16 %v1878
        %v1924 = vunpack.c.l.b16 %v1879
        %v1925 = vunpack.c.h.b16 %v1879
        %v1926 = vunpack.c.l.b16 %v1880
        %v1927 = vunpack.c.h.b16 %v1880
        %v1928 = vunpack.c.l.b16 %v1881
        %v1929 = vunpack.c.h.b16 %v1881
        %v1930 = vpack.c.b16 %v1900, %v1898
        %v1931 = vpack.c.b16 %v1901, %v1899
        %v1932 = vpack.c.b16 %v1904, %v1902
        %v1933 = vpack.c.b16 %v1905, %v1903
        %v1934 = vpack.c.b16 %v1908, %v1906
        %v1935 = vpack.c.b16 %v1909, %v1907
        %v1936 = vpack.c.b16 %v1912, %v1910
        %v1937 = vpack.c.b16 %v1913, %v1911
        %v1938 = vpack.c.b16 %v1916, %v1914
        %v1939 = vpack.c.b16 %v1917, %v1915
        %v1940 = vpack.c.b16 %v1920, %v1918
        %v1941 = vpack.c.b16 %v1921, %v1919
        %v1942 = vpack.c.b16 %v1924, %v1922
        %v1943 = vpack.c.b16 %v1925, %v1923
        %v1944 = vpack.c.b16 %v1928, %v1926
        %v1945 = vpack.c.b16 %v1929, %v1927
        %1962 = vmatpush.bf16.msra.mxu0 %v1944
        %1963 = vmatpush.bf16.msra.mxu0 %v1942
        %1964 = vmatpush.bf16.msra.mxu0 %v1940
        %1965 = vmatpush.bf16.msra.mxu0 %v1938
        %1966 = vmatpush.bf16.msra.mxu0 %v1936
        %1967 = vmatpush.bf16.msra.mxu0 %v1934
        %1968 = vmatpush.bf16.msra.mxu0 %v1932
        %1969 = vmatpush.bf16.msra.mxu0 %v1930
        %1970 = vmatmul.bf16.gmra.mxu0 %v1865
        %v1971 = vpop.f32.mrf.mxu0
        %v1972 = vadd.f32 0.0, %v1971
        %v1973 = vpop.f32.mrf.mxu0
        %v1974 = vadd.f32 0.0, %v1973
        %1975 = vdwg.mxu0
        %1976 = vmatpush.bf16.msra.mxu0 %v1945
        %1977 = vmatpush.bf16.msra.mxu0 %v1943
        %1978 = vmatpush.bf16.msra.mxu0 %v1941
        %1979 = vmatpush.bf16.msra.mxu0 %v1939
        %1980 = vmatpush.bf16.msra.mxu0 %v1937
        %1981 = vmatpush.bf16.msra.mxu0 %v1935
        %1982 = vmatpush.bf16.msra.mxu0 %v1933
        %1983 = vmatpush.bf16.msra.mxu0 %v1931
        %1984 = vmatmul.bf16.gmra.mxu0 %v1865
        %v1985 = vpop.f32.mrf.mxu0
        %v1986 = vadd.f32 0.0, %v1985
        %v1987 = vpop.f32.mrf.mxu0
        %v1988 = vadd.f32 0.0, %v1987
        %1989 = vdwg.mxu0
        %v1990 = vadd.f32 %v1861, %v1972
        %v1991 = vadd.f32 %v1862, %v1986
        %v1992 = vadd.f32 %v1863, %v1974
        %v1993 = vadd.f32 %v1864, %v1988
        %1994 = vst [vmem:[#allocation2] sm:$0xff] %v1990
        %1995 = vst [vmem:[#allocation2 + $0x8] sm:$0xff] %v1991
        %1996 = vst [vmem:[#allocation2 + $0x10] sm:$0xff] %v1992
        %1997 = vst [vmem:[#allocation2 + $0x18] sm:$0xff] %v1993
        // Predicated region
        $region89: #{tpu_custom_call.1} parent=59 // pred_check
          %p1998 = pneg %p546
        $region90: #{tpu_custom_call.1} parent=59 // pred_check_branch
          %2000 = sbr.rel (%p1998) target = $region92
        $region91: #{tpu_custom_call.1} parent=59 // pred_region
          %v2001 = vld [vmem:[#allocation2] sm:$0xff]
          %v2002 = vld [vmem:[#allocation2 + $0x8] sm:$0xff]
          %v2003 = vld [vmem:[#allocation2 + $0x10] sm:$0xff]
          %v2004 = vld [vmem:[#allocation2 + $0x18] sm:$0xff]
          %v2005 = vld [vmem:[%s9] sm:$0x3]
          %v2007 = vperm.slane %v2005, 0
          %v2008 = vperm.slane %v2005, 1
          %v2011 = vadd.f32 %v2001, %v2007
          %v2012 = vadd.f32 %v2002, %v2008
          %v2013 = vadd.f32 %v2003, %v2007
          %v2014 = vadd.f32 %v2004, %v2008
          %2015 = vst [vmem:[%s530] sm:$0xff] %v2011
          %2016 = vst [vmem:[%s530 + $0x8] sm:$0xff] %v2012
          %2017 = vst [vmem:[%s530 + $0x10] sm:$0xff] %v2013
          %2018 = vst [vmem:[%s530 + $0x18] sm:$0xff] %v2014
        $region92: #{tpu_custom_call.1} parent=59 // pred_fallthru
          _
        %s2019 = sand.u32 %s295, 1
        %s2020 = scalar_lea.sflag [#allocation6], %s2019
        %s2021 = sand.u32 %s295, 1
        %s2022 = smul.addr %s2021, 32
        %s2023 = scalar_lea.vmem [#allocation15], %s2022
        // Predicated region
        $region93: #{tpu_custom_call.1} parent=59 // pred_check
          %p2024 = pneg %p305
        $region94: #{tpu_custom_call.1} parent=59 // pred_check_branch
          %2026 = sbr.rel (%p2024) target = $region96
        $region95: #{tpu_custom_call.1} parent=59 // pred_region
          %2028 = vsyncadd %s2020, 0
          %s2029 = smul.addr %s34, 4
          %s2030 = smul.addr %s2029, 8
          %s2031 = scalar_lea.hbm %s10, %s2030
          %s2032 = sshll.u32 %s2023, 4
          %s2033 = int_to_ptr.vmem [resolvable:$true] %s2032
          %s2034 = sshll.u32 %s2031, 4
          %s2035 = int_to_ptr.hbm [resolvable:$true] %s2034
          %2040 = dma.vmem_to_hbm [thread:$0]  %s2033, 512, %s2035, %s2020, 256, 256, 16
        $region96: #{tpu_custom_call.1} parent=59 // pred_fallthru
          _
      $region60: #{tpu_custom_call.1} parent=5 // pred_fallthru
        _
      %p2041 = scmp.le.s32.totalorder 2, %s25
      // Predicated region
      $region97: #{tpu_custom_call.1} parent=5 // pred_check
        %p2042 = pneg %p2041
      $region98: #{tpu_custom_call.1} parent=5 // pred_check_branch
        %2044 = sbr.rel (%p2042) target = $region100
      $region99: #{tpu_custom_call.1} parent=5 // pred_region
        %s2045 = ssub.s32 %s25, 2
        // Predicated region
        $region101: #{tpu_custom_call.1} parent=99 // pred_check
          %p2046 = pneg %p311
        $region102: #{tpu_custom_call.1} parent=99 // pred_check_branch
          %2048 = sbr.rel (%p2046) target = $region104
        $region103: #{tpu_custom_call.1} parent=99 // pred_region
          %s2049 = sand.u32 %s296, 1
          %s2050 = scalar_lea.sflag [#allocation6], %s2049
          %s2051 = sand.u32 %s296, 1
          %s2052 = smul.addr %s2051, 32
          %s2053 = scalar_lea.vmem [#allocation15], %s2052
          %2055 = dma.done %s2050, 512
        $region104: #{tpu_custom_call.1} parent=99 // pred_fallthru
          _
      $region100: #{tpu_custom_call.1} parent=5 // pred_fallthru
        _
    $region6: #{tpu_custom_call.1} parent=1 // loop_footer
      %s29 = sadd.s32 1, %s25
    $region7: #{tpu_custom_call.1} parent=1 // loop_footer_branch
      %24 = sbr.rel target = $region3
    $region8: #{tpu_custom_call.1} parent=1 // loop_exit
      _
    %2056 = vsyncpa [#allocation5], 1
    %s2057 = scalar_lea.sflag [#allocation5], 1
    %2058 = vsyncpa %s2057, 1
    %2059 = vsyncpa [#allocation8], 1
    %2060 = vsyncpa [#allocation11], 1
    %2061 = vsyncpa [#allocation14], 1
    %2062 = vsyncpa [#allocation6], 1
    %s2063 = scalar_lea.sflag [#allocation6], 1
    %2064 = vsyncpa %s2063, 1

</llo_original>
